<compile_context>
chip_gen: v7x
topology: tpu7x:2x2x1
jax: 0.10.0
libtpu: 0.0.40
codegen_flags: <defaults>
</compile_context>

<pallas_src>
import jax
import jax.numpy as jnp
from jax.experimental import pallas as pl
from jax.experimental.pallas import tpu as pltpu

LANES = 128  # TPU vreg lane width


def vae_forward_kernel(
    x_ref,        # [TB, D]      flattened input tile (f32)
    w_enc_ref,    # [D, 2*LP]    fused, lane-padded encoder weight (bf16)
    b_enc_ref,    # [1, 2*LP]    fused, lane-padded encoder bias   (f32)
    eps_ref,      # [TB, LP]     lane-padded standard-normal noise (f32)
    w_dec_ref,    # [LP, D]      lane-padded decoder weight (bf16, rows >= L are 0)
    b_dec_ref,    # [1, D]       decoder bias (f32)
    recon_ref,    # [TB, D]      output: decode(z)
    stats_ref,    # [TB, 2*LP]   output: packed, lane-padded (mu | log_var)
):
    lp = eps_ref.shape[-1]  # padded latent dim (multiple of 128)

    # ---- encode: one fused bf16 MXU pass over K = D, f32 accumulation ----
    x_bf = x_ref[...].astype(jnp.bfloat16)
    enc = (
        jnp.dot(x_bf, w_enc_ref[...], preferred_element_type=jnp.float32)
        + b_enc_ref[...]
    )
    # mu / log_var occupy separate 128-lane blocks -> vreg-aligned slices.
    mu = enc[:, :lp]
    log_var = enc[:, lp:]

    # ---- reparameterize (f32 elementwise; exp goes to the EUP) ----
    # Padded columns: mu = log_var = 0 and eps = 0 there; together with the
    # zero rows of w_dec they are inert in the decoder.
    std = jnp.exp(0.5 * log_var)
    z = mu + std * eps_ref[...]

    # ---- decode (bf16 MXU, f32 accumulation) ----
    recon = (
        jnp.dot(z.astype(jnp.bfloat16), w_dec_ref[...],
                preferred_element_type=jnp.float32)
        + b_dec_ref[...]
    )

    recon_ref[...] = recon.astype(recon_ref.dtype)
    stats_ref[...] = enc.astype(stats_ref.dtype)   # packed (mu | log_var)


def _pick_batch_tile(B):
    """Whole batch if small, else a VMEM-friendly divisor.

    TB <= 512 keeps the double-buffered [TB, 1024] f32 input/output tiles
    comfortably inside v5e's 16 MiB scoped-VMEM default (and therefore also
    v6e's 32 MiB and v7x's 64 MiB budgets) while staying big enough (>= 512)
    to reach ~85% of the HBM roofline once the batch is large.
    """
    if B <= 512:
        return B
    for tb in (512, 256, 128, 64, 32, 16, 8):
        if B % tb == 0:
            return tb
    # TODO(synk): pad ragged batches instead of falling back to one giant tile.
    return B


def base_vae_forward(x_nchw, params, eps):
    """Fused VAE forward. x_nchw: [B, C, H, W] f32 -> (recon, mu, log_var)."""
    B, C, H, W = x_nchw.shape
    D = C * H * W
    L = eps.shape[-1]
    LP = params["w_dec"].shape[0]          # lane-padded latent (multiple of 128)
    assert LP % LANES == 0 and L <= LP

    # Flatten NCHW -> [B, D] (matches torch .view(B, -1) row-major order).
    x_flat = x_nchw.reshape(B, D)
    # Lane-pad eps to LP columns (zeros beyond L; inert downstream).
    eps_p = jnp.zeros((B, LP), jnp.float32).at[:, :L].set(eps.astype(jnp.float32))

    TB = _pick_batch_tile(B)
    grid = (pl.cdiv(B, TB),)

    in_specs = [
        pl.BlockSpec((TB, D), lambda i: (i, 0)),        # x        (batch-tiled)
        pl.BlockSpec((D, 2 * LP), lambda i: (0, 0)),    # w_enc    (VMEM-resident)
        pl.BlockSpec((1, 2 * LP), lambda i: (0, 0)),    # b_enc    (VMEM-resident)
        pl.BlockSpec((TB, LP), lambda i: (i, 0)),       # eps      (batch-tiled)
        pl.BlockSpec((LP, D), lambda i: (0, 0)),        # w_dec    (VMEM-resident)
        pl.BlockSpec((1, D), lambda i: (0, 0)),         # b_dec    (VMEM-resident)
    ]
    out_specs = (
        pl.BlockSpec((TB, D), lambda i: (i, 0)),        # recon
        pl.BlockSpec((TB, 2 * LP), lambda i: (i, 0)),   # packed (mu | log_var)
    )

    inputs = (x_flat, params["w_enc"], params["b_enc"], eps_p,
              params["w_dec"], params["b_dec"])

    # Cost estimate: weight bytes counted ONCE (VMEM-resident across steps).
    flops = 2 * B * D * (2 * LP) + 2 * B * LP * D
    weight_bytes = sum(int(params[k].size) * params[k].dtype.itemsize
                       for k in ("w_enc", "b_enc", "w_dec", "b_dec"))
    bytes_accessed = (
        B * D * 4            # x in
        + B * LP * 4         # eps in
        + weight_bytes       # weights in, once
        + B * D * 4          # recon out
        + B * 2 * LP * 4     # stats out
    )
    cost = pl.CostEstimate(flops=flops, transcendentals=B * LP,
                           bytes_accessed=bytes_accessed)

    recon, stats = pl.pallas_call(
        vae_forward_kernel,
        grid=grid,
        in_specs=in_specs,
        out_specs=out_specs,
        out_shape=(
            jax.ShapeDtypeStruct((B, D), jnp.float32),
            jax.ShapeDtypeStruct((B, 2 * LP), jnp.float32),
        ),
        compiler_params=pltpu.CompilerParams(
            dimension_semantics=("parallel",)),   # v7x: split batch over 2 TCs
        cost_estimate=cost,
    )(*inputs)

    mu = stats[:, :L]
    log_var = stats[:, LP:LP + L]
    # decode output reshaped back to the input's NCHW layout.
    return recon.reshape(B, C, H, W), mu, log_var


def init_params(key, D, L):
    """Gaussian MLP-VAE params, fused/lane-padded, weights stored in bf16."""
    lp = LANES * pl.cdiv(L, LANES)
    k1, k2, k3 = jax.random.split(key, 3)
    scale_enc = 1.0 / jnp.sqrt(jnp.float32(D))
    scale_dec = 1.0 / jnp.sqrt(jnp.float32(L))
    w_mu = jax.random.normal(k1, (D, L), jnp.float32) * scale_enc
    w_lv = jax.random.normal(k2, (D, L), jnp.float32) * scale_enc
    w_dec = jax.random.normal(k3, (L, D), jnp.float32) * scale_dec

    # Fused encoder weight, lane-padded: mu -> lanes [0, L), log_var -> [lp, lp+L).
    w_enc_p = jnp.zeros((D, 2 * lp), jnp.float32)
    w_enc_p = w_enc_p.at[:, :L].set(w_mu).at[:, lp:lp + L].set(w_lv)
    # Decoder weight zero-padded in the (contraction) row dim to lp.
    w_dec_p = jnp.zeros((lp, D), jnp.float32).at[:L, :].set(w_dec)

    return {
        "w_enc": w_enc_p.astype(jnp.bfloat16),
        "b_enc": jnp.zeros((1, 2 * lp), jnp.float32),
        "w_dec": w_dec_p.astype(jnp.bfloat16),
        "b_dec": jnp.zeros((1, D), jnp.float32),
    }


if __name__ == "__main__":
    B, C, H, W = 2, 4, 16, 16
    D = C * H * W          # 1024
    L = 32                 # latent dim

    key = jax.random.PRNGKey(0)
    k_x, k_p, k_eps = jax.random.split(key, 3)

    x = jax.random.normal(k_x, (B, C, H, W), jnp.float32)
    params = init_params(k_p, D, L)
    eps = jax.random.normal(k_eps, (B, L), jnp.float32)   # deterministic noise

    recon, mu, log_var = base_vae_forward(x, params, eps)
    jax.block_until_ready((recon, mu, log_var))

    # Pure-JAX reference of the same (bf16-weight / bf16-operand) math.
    LP = params["w_dec"].shape[0]
    x_flat = x.reshape(B, D)
    w_enc_f = params["w_enc"].astype(jnp.float32)
    w_dec_f = params["w_dec"].astype(jnp.float32)
    x_q = x_flat.astype(jnp.bfloat16).astype(jnp.float32)
    enc_ref = x_q @ w_enc_f + params["b_enc"]
    mu_ref = enc_ref[:, :L]
    lv_ref = enc_ref[:, LP:LP + L]
    z_ref = mu_ref + jnp.exp(0.5 * lv_ref) * eps
    z_q = z_ref.astype(jnp.bfloat16).astype(jnp.float32)
    recon_ref = (z_q @ w_dec_f[:L, :] + params["b_dec"]).reshape(B, C, H, W)

    assert jnp.allclose(mu, mu_ref, atol=1e-2, rtol=1e-2)
    assert jnp.allclose(log_var, lv_ref, atol=1e-2, rtol=1e-2)
    assert jnp.allclose(recon, recon_ref, atol=1e-2, rtol=1e-2)

    print("KERNEL_OK")
</pallas_src>

<mosaic_0001>
module attributes {stable_mosaic.version = 11 : i64} {
  func.func @vae_forward_kernel(%arg0: i32, %arg1: memref<2x1024xf32, #tpu.memory_space<vmem>>, %arg2: memref<1024x256xbf16, #tpu.memory_space<vmem>>, %arg3: memref<1x256xf32, #tpu.memory_space<vmem>>, %arg4: memref<2x128xf32, #tpu.memory_space<vmem>>, %arg5: memref<128x1024xbf16, #tpu.memory_space<vmem>>, %arg6: memref<1x1024xf32, #tpu.memory_space<vmem>>, %arg7: memref<2x1024xf32, #tpu.memory_space<vmem>>, %arg8: memref<2x256xf32, #tpu.memory_space<vmem>>) attributes {dimension_semantics = [#tpu.dimension_semantics<parallel>], iteration_bounds = array<i64: 1>, scalar_prefetch = 0 : i64, scratch_operands = 0 : i64, tpu.core_type = #tpu.core_type<tc>, window_params = [{transform_indices = @transform_0, window_bounds = array<i64: 2, 1024>}, {pipeline_mode = #tpu.pipeline_mode<synchronous>, transform_indices = @transform_1, window_bounds = array<i64: 1024, 256>}, {pipeline_mode = #tpu.pipeline_mode<synchronous>, transform_indices = @transform_2, window_bounds = array<i64: 1, 256>}, {transform_indices = @transform_3, window_bounds = array<i64: 2, 128>}, {pipeline_mode = #tpu.pipeline_mode<synchronous>, transform_indices = @transform_4, window_bounds = array<i64: 128, 1024>}, {pipeline_mode = #tpu.pipeline_mode<synchronous>, transform_indices = @transform_5, window_bounds = array<i64: 1, 1024>}, {transform_indices = @transform_6, window_bounds = array<i64: 2, 1024>}, {transform_indices = @transform_7, window_bounds = array<i64: 2, 256>}]} {
    %c0 = arith.constant 0 : index
    %c0_0 = arith.constant 0 : index
    %0 = vector.load %arg1[%c0, %c0_0] : memref<2x1024xf32, #tpu.memory_space<vmem>>, vector<2x1024xf32>
    %1 = arith.truncf %0 : vector<2x1024xf32> to vector<2x1024xbf16>
    %c0_1 = arith.constant 0 : index
    %c0_2 = arith.constant 0 : index
    %2 = vector.load %arg2[%c0_1, %c0_2] : memref<1024x256xbf16, #tpu.memory_space<vmem>>, vector<1024x256xbf16>
    %cst = arith.constant dense<0.000000e+00> : vector<2x256xf32>
    %3 = tpu.matmul %1, %2, %cst {dimension_numbers = #tpu.dot_dimension_numbers<[1], [0], [0], [1], [0, 0, 1, 1], [], []>} : vector<2x1024xbf16>, vector<1024x256xbf16>, vector<2x256xf32> -> vector<2x256xf32>
    %c0_3 = arith.constant 0 : index
    %c0_4 = arith.constant 0 : index
    %4 = vector.load %arg3[%c0_3, %c0_4] : memref<1x256xf32, #tpu.memory_space<vmem>>, vector<1x256xf32>
    %5 = vector.broadcast %4 : vector<1x256xf32> to vector<2x256xf32>
    %6 = arith.addf %3, %5 : vector<2x256xf32>
    %7 = vector.extract_strided_slice %6 {offsets = [0, 0], sizes = [2, 128], strides = [1, 1]} : vector<2x256xf32> to vector<2x128xf32>
    %8 = vector.extract_strided_slice %6 {offsets = [0, 128], sizes = [2, 128], strides = [1, 1]} : vector<2x256xf32> to vector<2x128xf32>
    %cst_5 = arith.constant 5.000000e-01 : f32
    %9 = vector.broadcast %cst_5 : f32 to vector<2x128xf32>
    %10 = arith.mulf %9, %8 : vector<2x128xf32>
    %11 = math.exp %10 : vector<2x128xf32>
    %c0_6 = arith.constant 0 : index
    %c0_7 = arith.constant 0 : index
    %12 = vector.load %arg4[%c0_6, %c0_7] : memref<2x128xf32, #tpu.memory_space<vmem>>, vector<2x128xf32>
    %13 = arith.mulf %11, %12 : vector<2x128xf32>
    %14 = arith.addf %7, %13 : vector<2x128xf32>
    %15 = arith.truncf %14 : vector<2x128xf32> to vector<2x128xbf16>
    %c0_8 = arith.constant 0 : index
    %c0_9 = arith.constant 0 : index
    %16 = vector.load %arg5[%c0_8, %c0_9] : memref<128x1024xbf16, #tpu.memory_space<vmem>>, vector<128x1024xbf16>
    %cst_10 = arith.constant dense<0.000000e+00> : vector<2x1024xf32>
    %17 = tpu.matmul %15, %16, %cst_10 {dimension_numbers = #tpu.dot_dimension_numbers<[1], [0], [0], [1], [0, 0, 1, 1], [], []>} : vector<2x128xbf16>, vector<128x1024xbf16>, vector<2x1024xf32> -> vector<2x1024xf32>
    %c0_11 = arith.constant 0 : index
    %c0_12 = arith.constant 0 : index
    %18 = vector.load %arg6[%c0_11, %c0_12] : memref<1x1024xf32, #tpu.memory_space<vmem>>, vector<1x1024xf32>
    %19 = vector.broadcast %18 : vector<1x1024xf32> to vector<2x1024xf32>
    %20 = arith.addf %17, %19 : vector<2x1024xf32>
    %c0_13 = arith.constant 0 : index
    %c0_14 = arith.constant 0 : index
    %21 = vector.load %arg7[%c0_13, %c0_14] : memref<2x1024xf32, #tpu.memory_space<vmem>>, vector<2x1024xf32>
    tpu.vector_store %arg7[%c0_13, %c0_14], %20 {strides = array<i32>} : memref<2x1024xf32, #tpu.memory_space<vmem>>, vector<2x1024xf32>,
    %c0_15 = arith.constant 0 : index
    %c0_16 = arith.constant 0 : index
    %22 = vector.load %arg8[%c0_15, %c0_16] : memref<2x256xf32, #tpu.memory_space<vmem>>, vector<2x256xf32>
    tpu.vector_store %arg8[%c0_15, %c0_16], %6 {strides = array<i32>} : memref<2x256xf32, #tpu.memory_space<vmem>>, vector<2x256xf32>,
    return
  }
  func.func @transform_0(%arg0: i32) -> (i32, i32) {
    %c0_i32 = arith.constant 0 : i32
    %c0_i32_0 = arith.constant 0 : i32
    return %arg0, %c0_i32 : i32, i32
  }
  func.func @transform_1(%arg0: i32) -> (i32, i32) {
    %c0_i32 = arith.constant 0 : i32
    %c0_i32_0 = arith.constant 0 : i32
    %c0_i32_1 = arith.constant 0 : i32
    return %c0_i32, %c0_i32_0 : i32, i32
  }
  func.func @transform_2(%arg0: i32) -> (i32, i32) {
    %c0_i32 = arith.constant 0 : i32
    %c0_i32_0 = arith.constant 0 : i32
    %c0_i32_1 = arith.constant 0 : i32
    return %c0_i32, %c0_i32_0 : i32, i32
  }
  func.func @transform_3(%arg0: i32) -> (i32, i32) {
    %c0_i32 = arith.constant 0 : i32
    %c0_i32_0 = arith.constant 0 : i32
    return %arg0, %c0_i32 : i32, i32
  }
  func.func @transform_4(%arg0: i32) -> (i32, i32) {
    %c0_i32 = arith.constant 0 : i32
    %c0_i32_0 = arith.constant 0 : i32
    %c0_i32_1 = arith.constant 0 : i32
    return %c0_i32, %c0_i32_0 : i32, i32
  }
  func.func @transform_5(%arg0: i32) -> (i32, i32) {
    %c0_i32 = arith.constant 0 : i32
    %c0_i32_0 = arith.constant 0 : i32
    %c0_i32_1 = arith.constant 0 : i32
    return %c0_i32, %c0_i32_0 : i32, i32
  }
  func.func @transform_6(%arg0: i32) -> (i32, i32) {
    %c0_i32 = arith.constant 0 : i32
    %c0_i32_0 = arith.constant 0 : i32
    return %arg0, %c0_i32 : i32, i32
  }
  func.func @transform_7(%arg0: i32) -> (i32, i32) {
    %c0_i32 = arith.constant 0 : i32
    %c0_i32_0 = arith.constant 0 : i32
    return %arg0, %c0_i32 : i32, i32
  }
}

</mosaic_0001>

<llo_original>
// kernel: tpu_custom_call.1
$region0: #{tpu_custom_call.1}
  #allocation0 [shape = 'u32[]', space=smem, size = 0x4, offset = 0x4, fixed_abs, tag = 'smem constant byte address 0x4 - core index']
  #allocation1 [shape = 'u32[144,128]{1,0:T(1,128)}', space=vmem, size = 0x12000, scoped, tag = 'internal scratch']
  %s0 = inlined_call_operand.hbm [shape: f32[2,1024], index: 0, kind: input, shape index: {}]
  %s1 = inlined_call_operand.hbm [shape: bf16[1024,256], index: 1, kind: input, shape index: {}]
  %s2 = inlined_call_operand.vmem [shape: f32[1,256], index: 2, kind: input, shape index: {}]
  %s3 = inlined_call_operand.vmem [shape: f32[2,128], index: 3, kind: input, shape index: {}]
  %s4 = inlined_call_operand.hbm [shape: bf16[128,1024], index: 4, kind: input, shape index: {}]
  %s5 = inlined_call_operand.vmem [shape: f32[1,1024], index: 5, kind: input, shape index: {}]
  %s6 = inlined_call_operand.hbm [shape: f32[2,1024], index: 6, kind: output, shape index: {0}]
  %s7 = inlined_call_operand.hbm [shape: f32[2,256], index: 7, kind: output, shape index: {1}]
  %8 = xla_tuple %s6, %s7
  %s9 = sld [smem:[#allocation0]]
  $region54: #{tpu_custom_call.1} parent=0
    _
  %s11 = ssub.s32 1, %s9
  %s12 = scalar_select 0, %s11, %s9
  $region1: #{tpu_custom_call.1} parent=0
    #allocation2 [shape = 'u8[8192]{0}', space=vmem, size = 0x2000, scoped, tag = 'input window, operand 0, single buffered']
    #allocation3 [shape = 's32[1]{0}', space=sflag, size = 0x4, scoped, tag = 'scoped memory for tpu_custom_call.1']
    #allocation4 [shape = 's32[1]{0}', space=sflag, size = 0x4, scoped, tag = 'scoped memory for tpu_custom_call.1']
    #allocation5 [shape = 'u8[524288]{0}', space=vmem, size = 0x80000, scoped, tag = 'input window, operand 1, single buffered']
    #allocation6 [shape = 's32[1]{0}', space=sflag, size = 0x4, scoped, tag = 'scoped memory for tpu_custom_call.1']
    #allocation7 [shape = 'u8[262144]{0}', space=vmem, size = 0x40000, scoped, tag = 'input window, operand 4, single buffered']
    #allocation8 [shape = 'u8[8192]{0}', space=vmem, size = 0x2000, scoped, tag = 'output window, operand 0, single buffered']
    #allocation9 [shape = 'u8[2048]{0}', space=vmem, size = 0x800, scoped, tag = 'output window, operand 1, single buffered']
    #allocation10 [shape = 's32[1]{0}', space=sflag, size = 0x4, scoped, tag = 'scoped memory for tpu_custom_call.1']
    %13 = vsyncpa [#allocation3], 0
    %14 = vsyncpa [#allocation6], 0
    %15 = vsyncpa [#allocation4], 0
    %16 = vsyncpa [#allocation10], 0
    // Predicated region
    $region2: #{tpu_custom_call.1} parent=1 // pred_check
      _
    $region3: #{tpu_custom_call.1} parent=1 // pred_check_branch
      %18 = sbr.rel (0) target = $region5
    $region4: #{tpu_custom_call.1} parent=1 // pred_region
      %s20 = ssub.s32 256, 256
      %21 = vsyncadd [#allocation3], %s20
      %s23 = sshll.u32 [#allocation2], 4
      %s24 = int_to_ptr.vmem [resolvable:$true] %s23
      %26 = dma.hbm_to_vmem [thread:$0]  %s0, 256, %s24, [#allocation3]
    $region5: #{tpu_custom_call.1} parent=1 // pred_fallthru
      _
    // Predicated region
    $region6: #{tpu_custom_call.1} parent=1 // pred_check
      _
    $region7: #{tpu_custom_call.1} parent=1 // pred_check_branch
      %28 = sbr.rel (0) target = $region9
    $region8: #{tpu_custom_call.1} parent=1 // pred_region
      %s30 = ssub.s32 16384, 16384
      %31 = vsyncadd [#allocation6], %s30
      %s32 = sshll.u32 [#allocation5], 4
      %s33 = int_to_ptr.vmem [resolvable:$true] %s32
      %38 = dma.hbm_to_vmem [thread:$0]  %s1, 16384, %s33, [#allocation6], 128, 128, 8
    $region9: #{tpu_custom_call.1} parent=1 // pred_fallthru
      _
    // Predicated region
    $region10: #{tpu_custom_call.1} parent=1 // pred_check
      _
    $region11: #{tpu_custom_call.1} parent=1 // pred_check_branch
      %40 = sbr.rel (0) target = $region13
    $region12: #{tpu_custom_call.1} parent=1 // pred_region
      _
    $region13: #{tpu_custom_call.1} parent=1 // pred_fallthru
      _
    // Predicated region
    $region14: #{tpu_custom_call.1} parent=1 // pred_check
      _
    $region15: #{tpu_custom_call.1} parent=1 // pred_check_branch
      %42 = sbr.rel (0) target = $region17
    $region16: #{tpu_custom_call.1} parent=1 // pred_region
      _
    $region17: #{tpu_custom_call.1} parent=1 // pred_fallthru
      _
    // Predicated region
    $region18: #{tpu_custom_call.1} parent=1 // pred_check
      _
    $region19: #{tpu_custom_call.1} parent=1 // pred_check_branch
      %44 = sbr.rel (0) target = $region21
    $region20: #{tpu_custom_call.1} parent=1 // pred_region
      %s46 = ssub.s32 8192, 8192
      %47 = vsyncadd [#allocation6], %s46
      %s48 = sshll.u32 [#allocation7], 4
      %s49 = int_to_ptr.vmem [resolvable:$true] %s48
      %54 = dma.hbm_to_vmem [thread:$0]  %s4, 8192, %s49, [#allocation6], 512, 512, 32
    $region21: #{tpu_custom_call.1} parent=1 // pred_fallthru
      _
    // Predicated region
    $region22: #{tpu_custom_call.1} parent=1 // pred_check
      _
    $region23: #{tpu_custom_call.1} parent=1 // pred_check_branch
      %56 = sbr.rel (0) target = $region25
    $region24: #{tpu_custom_call.1} parent=1 // pred_region
      _
    $region25: #{tpu_custom_call.1} parent=1 // pred_fallthru
      _
    // Predicated region
    $region26: #{tpu_custom_call.1} parent=1 // pred_check
      _
    $region27: #{tpu_custom_call.1} parent=1 // pred_check_branch
      %58 = sbr.rel (0) target = $region29
    $region28: #{tpu_custom_call.1} parent=1 // pred_region
      %59 = dma.done [#allocation3], 256
    $region29: #{tpu_custom_call.1} parent=1 // pred_fallthru
      _
    // Predicated region
    $region30: #{tpu_custom_call.1} parent=1 // pred_check
      _
    $region31: #{tpu_custom_call.1} parent=1 // pred_check_branch
      %61 = sbr.rel (0) target = $region33
    $region32: #{tpu_custom_call.1} parent=1 // pred_region
      %62 = dma.done [#allocation6], 16384
    $region33: #{tpu_custom_call.1} parent=1 // pred_fallthru
      _
    // Predicated region
    $region34: #{tpu_custom_call.1} parent=1 // pred_check
      _
    $region35: #{tpu_custom_call.1} parent=1 // pred_check_branch
      %64 = sbr.rel (0) target = $region37
    $region36: #{tpu_custom_call.1} parent=1 // pred_region
      %65 = dma.done [#allocation6], 8192
    $region37: #{tpu_custom_call.1} parent=1 // pred_fallthru
      _
    %v67 = vld [vmem:[#allocation2] sm:$0xff]
    %v68 = vld [vmem:[#allocation2 + $0x8] sm:$0xff]
    %v71 = vcombine.high %v67, %v67
    %v73 = vunpack.c.l.s4 1983009808
    %v74 = vunpack.c.0.s8 %v73
    %v75 = vlaneseq
    %v76 = vshrl.u32 %v75, 7
    %v77 = vsub.s32 %v74, %v76
    %v78 = vrot.slane %v67, %v77
    %v80 = vunpack.c.l.s4 1983009808
    %v81 = vunpack.c.0.s8 %v80
    %v82 = vlaneseq
    %v83 = vshrl.u32 %v82, 7
    %v84 = vsub.s32 %v81, %v83
    %v85 = vrot.slane %v71, %v84
    %v86 = vcombine.high %v78, %v78
    %v87 = vcombine.high %v85, %v85
    %v88 = vcombine.high %v68, %v68
    %v90 = vunpack.c.l.s4 1983009808
    %v91 = vunpack.c.0.s8 %v90
    %v92 = vlaneseq
    %v93 = vshrl.u32 %v92, 7
    %v94 = vsub.s32 %v91, %v93
    %v95 = vrot.slane %v68, %v94
    %v97 = vunpack.c.l.s4 1983009808
    %v98 = vunpack.c.0.s8 %v97
    %v99 = vlaneseq
    %v100 = vshrl.u32 %v99, 7
    %v101 = vsub.s32 %v98, %v100
    %v102 = vrot.slane %v88, %v101
    %v103 = vcombine.high %v95, %v95
    %v104 = vcombine.high %v102, %v102
    %v113 = vpack.c.bf16 %v78, %v78
    %v114 = vpack.c.bf16 %v86, %v86
    %v115 = vpack.c.bf16 %v85, %v85
    %v116 = vpack.c.bf16 %v87, %v87
    %v117 = vpack.c.bf16 %v95, %v95
    %v118 = vpack.c.bf16 %v103, %v103
    %v119 = vpack.c.bf16 %v102, %v102
    %v120 = vpack.c.bf16 %v104, %v104
    %v121 = vld [vmem:[#allocation5] sm:$0xff]
    %v122 = vld [vmem:[#allocation5 + $0x8] sm:$0xff]
    %v123 = vld [vmem:[#allocation5 + $0x10] sm:$0xff]
    %v124 = vld [vmem:[#allocation5 + $0x18] sm:$0xff]
    %v125 = vld [vmem:[#allocation5 + $0x20] sm:$0xff]
    %v126 = vld [vmem:[#allocation5 + $0x28] sm:$0xff]
    %v127 = vld [vmem:[#allocation5 + $0x30] sm:$0xff]
    %v128 = vld [vmem:[#allocation5 + $0x38] sm:$0xff]
    %v129 = vld [vmem:[#allocation5 + $0x40] sm:$0xff]
    %v130 = vld [vmem:[#allocation5 + $0x48] sm:$0xff]
    %v131 = vld [vmem:[#allocation5 + $0x50] sm:$0xff]
    %v132 = vld [vmem:[#allocation5 + $0x58] sm:$0xff]
    %v133 = vld [vmem:[#allocation5 + $0x60] sm:$0xff]
    %v134 = vld [vmem:[#allocation5 + $0x68] sm:$0xff]
    %v135 = vld [vmem:[#allocation5 + $0x70] sm:$0xff]
    %v136 = vld [vmem:[#allocation5 + $0x78] sm:$0xff]
    %v137 = vld [vmem:[#allocation5 + $0x80] sm:$0xff]
    %v138 = vld [vmem:[#allocation5 + $0x88] sm:$0xff]
    %v139 = vld [vmem:[#allocation5 + $0x90] sm:$0xff]
    %v140 = vld [vmem:[#allocation5 + $0x98] sm:$0xff]
    %v141 = vld [vmem:[#allocation5 + $0xa0] sm:$0xff]
    %v142 = vld [vmem:[#allocation5 + $0xa8] sm:$0xff]
    %v143 = vld [vmem:[#allocation5 + $0xb0] sm:$0xff]
    %v144 = vld [vmem:[#allocation5 + $0xb8] sm:$0xff]
    %v145 = vld [vmem:[#allocation5 + $0xc0] sm:$0xff]
    %v146 = vld [vmem:[#allocation5 + $0xc8] sm:$0xff]
    %v147 = vld [vmem:[#allocation5 + $0xd0] sm:$0xff]
    %v148 = vld [vmem:[#allocation5 + $0xd8] sm:$0xff]
    %v149 = vld [vmem:[#allocation5 + $0xe0] sm:$0xff]
    %v150 = vld [vmem:[#allocation5 + $0xe8] sm:$0xff]
    %v151 = vld [vmem:[#allocation5 + $0xf0] sm:$0xff]
    %v152 = vld [vmem:[#allocation5 + $0xf8] sm:$0xff]
    %v153 = vld [vmem:[#allocation5 + $0x100] sm:$0xff]
    %v154 = vld [vmem:[#allocation5 + $0x108] sm:$0xff]
    %v155 = vld [vmem:[#allocation5 + $0x110] sm:$0xff]
    %v156 = vld [vmem:[#allocation5 + $0x118] sm:$0xff]
    %v157 = vld [vmem:[#allocation5 + $0x120] sm:$0xff]
    %v158 = vld [vmem:[#allocation5 + $0x128] sm:$0xff]
    %v159 = vld [vmem:[#allocation5 + $0x130] sm:$0xff]
    %v160 = vld [vmem:[#allocation5 + $0x138] sm:$0xff]
    %v161 = vld [vmem:[#allocation5 + $0x140] sm:$0xff]
    %v162 = vld [vmem:[#allocation5 + $0x148] sm:$0xff]
    %v163 = vld [vmem:[#allocation5 + $0x150] sm:$0xff]
    %v164 = vld [vmem:[#allocation5 + $0x158] sm:$0xff]
    %v165 = vld [vmem:[#allocation5 + $0x160] sm:$0xff]
    %v166 = vld [vmem:[#allocation5 + $0x168] sm:$0xff]
    %v167 = vld [vmem:[#allocation5 + $0x170] sm:$0xff]
    %v168 = vld [vmem:[#allocation5 + $0x178] sm:$0xff]
    %v169 = vld [vmem:[#allocation5 + $0x180] sm:$0xff]
    %v170 = vld [vmem:[#allocation5 + $0x188] sm:$0xff]
    %v171 = vld [vmem:[#allocation5 + $0x190] sm:$0xff]
    %v172 = vld [vmem:[#allocation5 + $0x198] sm:$0xff]
    %v173 = vld [vmem:[#allocation5 + $0x1a0] sm:$0xff]
    %v174 = vld [vmem:[#allocation5 + $0x1a8] sm:$0xff]
    %v175 = vld [vmem:[#allocation5 + $0x1b0] sm:$0xff]
    %v176 = vld [vmem:[#allocation5 + $0x1b8] sm:$0xff]
    %v177 = vld [vmem:[#allocation5 + $0x1c0] sm:$0xff]
    %v178 = vld [vmem:[#allocation5 + $0x1c8] sm:$0xff]
    %v179 = vld [vmem:[#allocation5 + $0x1d0] sm:$0xff]
    %v180 = vld [vmem:[#allocation5 + $0x1d8] sm:$0xff]
    %v181 = vld [vmem:[#allocation5 + $0x1e0] sm:$0xff]
    %v182 = vld [vmem:[#allocation5 + $0x1e8] sm:$0xff]
    %v183 = vld [vmem:[#allocation5 + $0x1f0] sm:$0xff]
    %v184 = vld [vmem:[#allocation5 + $0x1f8] sm:$0xff]
    %v185 = vld [vmem:[#allocation5 + $0x200] sm:$0xff]
    %v186 = vld [vmem:[#allocation5 + $0x208] sm:$0xff]
    %v187 = vld [vmem:[#allocation5 + $0x210] sm:$0xff]
    %v188 = vld [vmem:[#allocation5 + $0x218] sm:$0xff]
    %v189 = vld [vmem:[#allocation5 + $0x220] sm:$0xff]
    %v190 = vld [vmem:[#allocation5 + $0x228] sm:$0xff]
    %v191 = vld [vmem:[#allocation5 + $0x230] sm:$0xff]
    %v192 = vld [vmem:[#allocation5 + $0x238] sm:$0xff]
    %v193 = vld [vmem:[#allocation5 + $0x240] sm:$0xff]
    %v194 = vld [vmem:[#allocation5 + $0x248] sm:$0xff]
    %v195 = vld [vmem:[#allocation5 + $0x250] sm:$0xff]
    %v196 = vld [vmem:[#allocation5 + $0x258] sm:$0xff]
    %v197 = vld [vmem:[#allocation5 + $0x260] sm:$0xff]
    %v198 = vld [vmem:[#allocation5 + $0x268] sm:$0xff]
    %v199 = vld [vmem:[#allocation5 + $0x270] sm:$0xff]
    %v200 = vld [vmem:[#allocation5 + $0x278] sm:$0xff]
    %v201 = vld [vmem:[#allocation5 + $0x280] sm:$0xff]
    %v202 = vld [vmem:[#allocation5 + $0x288] sm:$0xff]
    %v203 = vld [vmem:[#allocation5 + $0x290] sm:$0xff]
    %v204 = vld [vmem:[#allocation5 + $0x298] sm:$0xff]
    %v205 = vld [vmem:[#allocation5 + $0x2a0] sm:$0xff]
    %v206 = vld [vmem:[#allocation5 + $0x2a8] sm:$0xff]
    %v207 = vld [vmem:[#allocation5 + $0x2b0] sm:$0xff]
    %v208 = vld [vmem:[#allocation5 + $0x2b8] sm:$0xff]
    %v209 = vld [vmem:[#allocation5 + $0x2c0] sm:$0xff]
    %v210 = vld [vmem:[#allocation5 + $0x2c8] sm:$0xff]
    %v211 = vld [vmem:[#allocation5 + $0x2d0] sm:$0xff]
    %v212 = vld [vmem:[#allocation5 + $0x2d8] sm:$0xff]
    %v213 = vld [vmem:[#allocation5 + $0x2e0] sm:$0xff]
    %v214 = vld [vmem:[#allocation5 + $0x2e8] sm:$0xff]
    %v215 = vld [vmem:[#allocation5 + $0x2f0] sm:$0xff]
    %v216 = vld [vmem:[#allocation5 + $0x2f8] sm:$0xff]
    %v217 = vld [vmem:[#allocation5 + $0x300] sm:$0xff]
    %v218 = vld [vmem:[#allocation5 + $0x308] sm:$0xff]
    %v219 = vld [vmem:[#allocation5 + $0x310] sm:$0xff]
    %v220 = vld [vmem:[#allocation5 + $0x318] sm:$0xff]
    %v221 = vld [vmem:[#allocation5 + $0x320] sm:$0xff]
    %v222 = vld [vmem:[#allocation5 + $0x328] sm:$0xff]
    %v223 = vld [vmem:[#allocation5 + $0x330] sm:$0xff]
    %v224 = vld [vmem:[#allocation5 + $0x338] sm:$0xff]
    %v225 = vld [vmem:[#allocation5 + $0x340] sm:$0xff]
    %v226 = vld [vmem:[#allocation5 + $0x348] sm:$0xff]
    %v227 = vld [vmem:[#allocation5 + $0x350] sm:$0xff]
    %v228 = vld [vmem:[#allocation5 + $0x358] sm:$0xff]
    %v229 = vld [vmem:[#allocation5 + $0x360] sm:$0xff]
    %v230 = vld [vmem:[#allocation5 + $0x368] sm:$0xff]
    %v231 = vld [vmem:[#allocation5 + $0x370] sm:$0xff]
    %v232 = vld [vmem:[#allocation5 + $0x378] sm:$0xff]
    %v233 = vld [vmem:[#allocation5 + $0x380] sm:$0xff]
    %v234 = vld [vmem:[#allocation5 + $0x388] sm:$0xff]
    %v235 = vld [vmem:[#allocation5 + $0x390] sm:$0xff]
    %v236 = vld [vmem:[#allocation5 + $0x398] sm:$0xff]
    %v237 = vld [vmem:[#allocation5 + $0x3a0] sm:$0xff]
    %v238 = vld [vmem:[#allocation5 + $0x3a8] sm:$0xff]
    %v239 = vld [vmem:[#allocation5 + $0x3b0] sm:$0xff]
    %v240 = vld [vmem:[#allocation5 + $0x3b8] sm:$0xff]
    %v241 = vld [vmem:[#allocation5 + $0x3c0] sm:$0xff]
    %v242 = vld [vmem:[#allocation5 + $0x3c8] sm:$0xff]
    %v243 = vld [vmem:[#allocation5 + $0x3d0] sm:$0xff]
    %v244 = vld [vmem:[#allocation5 + $0x3d8] sm:$0xff]
    %v245 = vld [vmem:[#allocation5 + $0x3e0] sm:$0xff]
    %v246 = vld [vmem:[#allocation5 + $0x3e8] sm:$0xff]
    %v247 = vld [vmem:[#allocation5 + $0x3f0] sm:$0xff]
    %v248 = vld [vmem:[#allocation5 + $0x3f8] sm:$0xff]
    %v249 = vld [vmem:[%s2] sm:$0x3]
    %v251 = vlaneseq
    %v252 = vshrl.u32 %v251, 7
    %v253 = vsub.s32 0, %v252
    %v254 = vrot.slane %v249, %v253
    %v255 = vlaneseq
    %v256 = vshrl.u32 %v255, 7
    %v257 = vsub.s32 1, %v256
    %v258 = vrot.slane %v249, %v257
    %v389 = vunpack.c.l.b16 %v121
    %v390 = vunpack.c.h.b16 %v121
    %v391 = vunpack.c.l.b16 %v122
    %v392 = vunpack.c.h.b16 %v122
    %v393 = vunpack.c.l.b16 %v123
    %v394 = vunpack.c.h.b16 %v123
    %v395 = vunpack.c.l.b16 %v124
    %v396 = vunpack.c.h.b16 %v124
    %v397 = vunpack.c.l.b16 %v125
    %v398 = vunpack.c.h.b16 %v125
    %v399 = vunpack.c.l.b16 %v126
    %v400 = vunpack.c.h.b16 %v126
    %v401 = vunpack.c.l.b16 %v127
    %v402 = vunpack.c.h.b16 %v127
    %v403 = vunpack.c.l.b16 %v128
    %v404 = vunpack.c.h.b16 %v128
    %v405 = vunpack.c.l.b16 %v129
    %v406 = vunpack.c.h.b16 %v129
    %v407 = vunpack.c.l.b16 %v130
    %v408 = vunpack.c.h.b16 %v130
    %v409 = vunpack.c.l.b16 %v131
    %v410 = vunpack.c.h.b16 %v131
    %v411 = vunpack.c.l.b16 %v132
    %v412 = vunpack.c.h.b16 %v132
    %v413 = vunpack.c.l.b16 %v133
    %v414 = vunpack.c.h.b16 %v133
    %v415 = vunpack.c.l.b16 %v134
    %v416 = vunpack.c.h.b16 %v134
    %v417 = vunpack.c.l.b16 %v135
    %v418 = vunpack.c.h.b16 %v135
    %v419 = vunpack.c.l.b16 %v136
    %v420 = vunpack.c.h.b16 %v136
    %v421 = vunpack.c.l.b16 %v137
    %v422 = vunpack.c.h.b16 %v137
    %v423 = vunpack.c.l.b16 %v138
    %v424 = vunpack.c.h.b16 %v138
    %v425 = vunpack.c.l.b16 %v139
    %v426 = vunpack.c.h.b16 %v139
    %v427 = vunpack.c.l.b16 %v140
    %v428 = vunpack.c.h.b16 %v140
    %v429 = vunpack.c.l.b16 %v141
    %v430 = vunpack.c.h.b16 %v141
    %v431 = vunpack.c.l.b16 %v142
    %v432 = vunpack.c.h.b16 %v142
    %v433 = vunpack.c.l.b16 %v143
    %v434 = vunpack.c.h.b16 %v143
    %v435 = vunpack.c.l.b16 %v144
    %v436 = vunpack.c.h.b16 %v144
    %v437 = vunpack.c.l.b16 %v145
    %v438 = vunpack.c.h.b16 %v145
    %v439 = vunpack.c.l.b16 %v146
    %v440 = vunpack.c.h.b16 %v146
    %v441 = vunpack.c.l.b16 %v147
    %v442 = vunpack.c.h.b16 %v147
    %v443 = vunpack.c.l.b16 %v148
    %v444 = vunpack.c.h.b16 %v148
    %v445 = vunpack.c.l.b16 %v149
    %v446 = vunpack.c.h.b16 %v149
    %v447 = vunpack.c.l.b16 %v150
    %v448 = vunpack.c.h.b16 %v150
    %v449 = vunpack.c.l.b16 %v151
    %v450 = vunpack.c.h.b16 %v151
    %v451 = vunpack.c.l.b16 %v152
    %v452 = vunpack.c.h.b16 %v152
    %v453 = vunpack.c.l.b16 %v153
    %v454 = vunpack.c.h.b16 %v153
    %v455 = vunpack.c.l.b16 %v154
    %v456 = vunpack.c.h.b16 %v154
    %v457 = vunpack.c.l.b16 %v155
    %v458 = vunpack.c.h.b16 %v155
    %v459 = vunpack.c.l.b16 %v156
    %v460 = vunpack.c.h.b16 %v156
    %v461 = vunpack.c.l.b16 %v157
    %v462 = vunpack.c.h.b16 %v157
    %v463 = vunpack.c.l.b16 %v158
    %v464 = vunpack.c.h.b16 %v158
    %v465 = vunpack.c.l.b16 %v159
    %v466 = vunpack.c.h.b16 %v159
    %v467 = vunpack.c.l.b16 %v160
    %v468 = vunpack.c.h.b16 %v160
    %v469 = vunpack.c.l.b16 %v161
    %v470 = vunpack.c.h.b16 %v161
    %v471 = vunpack.c.l.b16 %v162
    %v472 = vunpack.c.h.b16 %v162
    %v473 = vunpack.c.l.b16 %v163
    %v474 = vunpack.c.h.b16 %v163
    %v475 = vunpack.c.l.b16 %v164
    %v476 = vunpack.c.h.b16 %v164
    %v477 = vunpack.c.l.b16 %v165
    %v478 = vunpack.c.h.b16 %v165
    %v479 = vunpack.c.l.b16 %v166
    %v480 = vunpack.c.h.b16 %v166
    %v481 = vunpack.c.l.b16 %v167
    %v482 = vunpack.c.h.b16 %v167
    %v483 = vunpack.c.l.b16 %v168
    %v484 = vunpack.c.h.b16 %v168
    %v485 = vunpack.c.l.b16 %v169
    %v486 = vunpack.c.h.b16 %v169
    %v487 = vunpack.c.l.b16 %v170
    %v488 = vunpack.c.h.b16 %v170
    %v489 = vunpack.c.l.b16 %v171
    %v490 = vunpack.c.h.b16 %v171
    %v491 = vunpack.c.l.b16 %v172
    %v492 = vunpack.c.h.b16 %v172
    %v493 = vunpack.c.l.b16 %v173
    %v494 = vunpack.c.h.b16 %v173
    %v495 = vunpack.c.l.b16 %v174
    %v496 = vunpack.c.h.b16 %v174
    %v497 = vunpack.c.l.b16 %v175
    %v498 = vunpack.c.h.b16 %v175
    %v499 = vunpack.c.l.b16 %v176
    %v500 = vunpack.c.h.b16 %v176
    %v501 = vunpack.c.l.b16 %v177
    %v502 = vunpack.c.h.b16 %v177
    %v503 = vunpack.c.l.b16 %v178
    %v504 = vunpack.c.h.b16 %v178
    %v505 = vunpack.c.l.b16 %v179
    %v506 = vunpack.c.h.b16 %v179
    %v507 = vunpack.c.l.b16 %v180
    %v508 = vunpack.c.h.b16 %v180
    %v509 = vunpack.c.l.b16 %v181
    %v510 = vunpack.c.h.b16 %v181
    %v511 = vunpack.c.l.b16 %v182
    %v512 = vunpack.c.h.b16 %v182
    %v513 = vunpack.c.l.b16 %v183
    %v514 = vunpack.c.h.b16 %v183
    %v515 = vunpack.c.l.b16 %v184
    %v516 = vunpack.c.h.b16 %v184
    %v517 = vunpack.c.l.b16 %v185
    %v518 = vunpack.c.h.b16 %v185
    %v519 = vunpack.c.l.b16 %v186
    %v520 = vunpack.c.h.b16 %v186
    %v521 = vunpack.c.l.b16 %v187
    %v522 = vunpack.c.h.b16 %v187
    %v523 = vunpack.c.l.b16 %v188
    %v524 = vunpack.c.h.b16 %v188
    %v525 = vunpack.c.l.b16 %v189
    %v526 = vunpack.c.h.b16 %v189
    %v527 = vunpack.c.l.b16 %v190
    %v528 = vunpack.c.h.b16 %v190
    %v529 = vunpack.c.l.b16 %v191
    %v530 = vunpack.c.h.b16 %v191
    %v531 = vunpack.c.l.b16 %v192
    %v532 = vunpack.c.h.b16 %v192
    %v533 = vunpack.c.l.b16 %v193
    %v534 = vunpack.c.h.b16 %v193
    %v535 = vunpack.c.l.b16 %v194
    %v536 = vunpack.c.h.b16 %v194
    %v537 = vunpack.c.l.b16 %v195
    %v538 = vunpack.c.h.b16 %v195
    %v539 = vunpack.c.l.b16 %v196
    %v540 = vunpack.c.h.b16 %v196
    %v541 = vunpack.c.l.b16 %v197
    %v542 = vunpack.c.h.b16 %v197
    %v543 = vunpack.c.l.b16 %v198
    %v544 = vunpack.c.h.b16 %v198
    %v545 = vunpack.c.l.b16 %v199
    %v546 = vunpack.c.h.b16 %v199
    %v547 = vunpack.c.l.b16 %v200
    %v548 = vunpack.c.h.b16 %v200
    %v549 = vunpack.c.l.b16 %v201
    %v550 = vunpack.c.h.b16 %v201
    %v551 = vunpack.c.l.b16 %v202
    %v552 = vunpack.c.h.b16 %v202
    %v553 = vunpack.c.l.b16 %v203
    %v554 = vunpack.c.h.b16 %v203
    %v555 = vunpack.c.l.b16 %v204
    %v556 = vunpack.c.h.b16 %v204
    %v557 = vunpack.c.l.b16 %v205
    %v558 = vunpack.c.h.b16 %v205
    %v559 = vunpack.c.l.b16 %v206
    %v560 = vunpack.c.h.b16 %v206
    %v561 = vunpack.c.l.b16 %v207
    %v562 = vunpack.c.h.b16 %v207
    %v563 = vunpack.c.l.b16 %v208
    %v564 = vunpack.c.h.b16 %v208
    %v565 = vunpack.c.l.b16 %v209
    %v566 = vunpack.c.h.b16 %v209
    %v567 = vunpack.c.l.b16 %v210
    %v568 = vunpack.c.h.b16 %v210
    %v569 = vunpack.c.l.b16 %v211
    %v570 = vunpack.c.h.b16 %v211
    %v571 = vunpack.c.l.b16 %v212
    %v572 = vunpack.c.h.b16 %v212
    %v573 = vunpack.c.l.b16 %v213
    %v574 = vunpack.c.h.b16 %v213
    %v575 = vunpack.c.l.b16 %v214
    %v576 = vunpack.c.h.b16 %v214
    %v577 = vunpack.c.l.b16 %v215
    %v578 = vunpack.c.h.b16 %v215
    %v579 = vunpack.c.l.b16 %v216
    %v580 = vunpack.c.h.b16 %v216
    %v581 = vunpack.c.l.b16 %v217
    %v582 = vunpack.c.h.b16 %v217
    %v583 = vunpack.c.l.b16 %v218
    %v584 = vunpack.c.h.b16 %v218
    %v585 = vunpack.c.l.b16 %v219
    %v586 = vunpack.c.h.b16 %v219
    %v587 = vunpack.c.l.b16 %v220
    %v588 = vunpack.c.h.b16 %v220
    %v589 = vunpack.c.l.b16 %v221
    %v590 = vunpack.c.h.b16 %v221
    %v591 = vunpack.c.l.b16 %v222
    %v592 = vunpack.c.h.b16 %v222
    %v593 = vunpack.c.l.b16 %v223
    %v594 = vunpack.c.h.b16 %v223
    %v595 = vunpack.c.l.b16 %v224
    %v596 = vunpack.c.h.b16 %v224
    %v597 = vunpack.c.l.b16 %v225
    %v598 = vunpack.c.h.b16 %v225
    %v599 = vunpack.c.l.b16 %v226
    %v600 = vunpack.c.h.b16 %v226
    %v601 = vunpack.c.l.b16 %v227
    %v602 = vunpack.c.h.b16 %v227
    %v603 = vunpack.c.l.b16 %v228
    %v604 = vunpack.c.h.b16 %v228
    %v605 = vunpack.c.l.b16 %v229
    %v606 = vunpack.c.h.b16 %v229
    %v607 = vunpack.c.l.b16 %v230
    %v608 = vunpack.c.h.b16 %v230
    %v609 = vunpack.c.l.b16 %v231
    %v610 = vunpack.c.h.b16 %v231
    %v611 = vunpack.c.l.b16 %v232
    %v612 = vunpack.c.h.b16 %v232
    %v613 = vunpack.c.l.b16 %v233
    %v614 = vunpack.c.h.b16 %v233
    %v615 = vunpack.c.l.b16 %v234
    %v616 = vunpack.c.h.b16 %v234
    %v617 = vunpack.c.l.b16 %v235
    %v618 = vunpack.c.h.b16 %v235
    %v619 = vunpack.c.l.b16 %v236
    %v620 = vunpack.c.h.b16 %v236
    %v621 = vunpack.c.l.b16 %v237
    %v622 = vunpack.c.h.b16 %v237
    %v623 = vunpack.c.l.b16 %v238
    %v624 = vunpack.c.h.b16 %v238
    %v625 = vunpack.c.l.b16 %v239
    %v626 = vunpack.c.h.b16 %v239
    %v627 = vunpack.c.l.b16 %v240
    %v628 = vunpack.c.h.b16 %v240
    %v629 = vunpack.c.l.b16 %v241
    %v630 = vunpack.c.h.b16 %v241
    %v631 = vunpack.c.l.b16 %v242
    %v632 = vunpack.c.h.b16 %v242
    %v633 = vunpack.c.l.b16 %v243
    %v634 = vunpack.c.h.b16 %v243
    %v635 = vunpack.c.l.b16 %v244
    %v636 = vunpack.c.h.b16 %v244
    %v637 = vunpack.c.l.b16 %v245
    %v638 = vunpack.c.h.b16 %v245
    %v639 = vunpack.c.l.b16 %v246
    %v640 = vunpack.c.h.b16 %v246
    %v641 = vunpack.c.l.b16 %v247
    %v642 = vunpack.c.h.b16 %v247
    %v643 = vunpack.c.l.b16 %v248
    %v644 = vunpack.c.h.b16 %v248
    %v645 = vpack.c.b16 %v391, %v389
    %v646 = vpack.c.b16 %v392, %v390
    %v647 = vpack.c.b16 %v395, %v393
    %v648 = vpack.c.b16 %v396, %v394
    %v649 = vpack.c.b16 %v399, %v397
    %v650 = vpack.c.b16 %v400, %v398
    %v651 = vpack.c.b16 %v403, %v401
    %v652 = vpack.c.b16 %v404, %v402
    %v653 = vpack.c.b16 %v407, %v405
    %v654 = vpack.c.b16 %v408, %v406
    %v655 = vpack.c.b16 %v411, %v409
    %v656 = vpack.c.b16 %v412, %v410
    %v657 = vpack.c.b16 %v415, %v413
    %v658 = vpack.c.b16 %v416, %v414
    %v659 = vpack.c.b16 %v419, %v417
    %v660 = vpack.c.b16 %v420, %v418
    %v661 = vpack.c.b16 %v423, %v421
    %v662 = vpack.c.b16 %v424, %v422
    %v663 = vpack.c.b16 %v427, %v425
    %v664 = vpack.c.b16 %v428, %v426
    %v665 = vpack.c.b16 %v431, %v429
    %v666 = vpack.c.b16 %v432, %v430
    %v667 = vpack.c.b16 %v435, %v433
    %v668 = vpack.c.b16 %v436, %v434
    %v669 = vpack.c.b16 %v439, %v437
    %v670 = vpack.c.b16 %v440, %v438
    %v671 = vpack.c.b16 %v443, %v441
    %v672 = vpack.c.b16 %v444, %v442
    %v673 = vpack.c.b16 %v447, %v445
    %v674 = vpack.c.b16 %v448, %v446
    %v675 = vpack.c.b16 %v451, %v449
    %v676 = vpack.c.b16 %v452, %v450
    %v677 = vpack.c.b16 %v455, %v453
    %v678 = vpack.c.b16 %v456, %v454
    %v679 = vpack.c.b16 %v459, %v457
    %v680 = vpack.c.b16 %v460, %v458
    %v681 = vpack.c.b16 %v463, %v461
    %v682 = vpack.c.b16 %v464, %v462
    %v683 = vpack.c.b16 %v467, %v465
    %v684 = vpack.c.b16 %v468, %v466
    %v685 = vpack.c.b16 %v471, %v469
    %v686 = vpack.c.b16 %v472, %v470
    %v687 = vpack.c.b16 %v475, %v473
    %v688 = vpack.c.b16 %v476, %v474
    %v689 = vpack.c.b16 %v479, %v477
    %v690 = vpack.c.b16 %v480, %v478
    %v691 = vpack.c.b16 %v483, %v481
    %v692 = vpack.c.b16 %v484, %v482
    %v693 = vpack.c.b16 %v487, %v485
    %v694 = vpack.c.b16 %v488, %v486
    %v695 = vpack.c.b16 %v491, %v489
    %v696 = vpack.c.b16 %v492, %v490
    %v697 = vpack.c.b16 %v495, %v493
    %v698 = vpack.c.b16 %v496, %v494
    %v699 = vpack.c.b16 %v499, %v497
    %v700 = vpack.c.b16 %v500, %v498
    %v701 = vpack.c.b16 %v503, %v501
    %v702 = vpack.c.b16 %v504, %v502
    %v703 = vpack.c.b16 %v507, %v505
    %v704 = vpack.c.b16 %v508, %v506
    %v705 = vpack.c.b16 %v511, %v509
    %v706 = vpack.c.b16 %v512, %v510
    %v707 = vpack.c.b16 %v515, %v513
    %v708 = vpack.c.b16 %v516, %v514
    %v709 = vpack.c.b16 %v519, %v517
    %v710 = vpack.c.b16 %v520, %v518
    %v711 = vpack.c.b16 %v523, %v521
    %v712 = vpack.c.b16 %v524, %v522
    %v713 = vpack.c.b16 %v527, %v525
    %v714 = vpack.c.b16 %v528, %v526
    %v715 = vpack.c.b16 %v531, %v529
    %v716 = vpack.c.b16 %v532, %v530
    %v717 = vpack.c.b16 %v535, %v533
    %v718 = vpack.c.b16 %v536, %v534
    %v719 = vpack.c.b16 %v539, %v537
    %v720 = vpack.c.b16 %v540, %v538
    %v721 = vpack.c.b16 %v543, %v541
    %v722 = vpack.c.b16 %v544, %v542
    %v723 = vpack.c.b16 %v547, %v545
    %v724 = vpack.c.b16 %v548, %v546
    %v725 = vpack.c.b16 %v551, %v549
    %v726 = vpack.c.b16 %v552, %v550
    %v727 = vpack.c.b16 %v555, %v553
    %v728 = vpack.c.b16 %v556, %v554
    %v729 = vpack.c.b16 %v559, %v557
    %v730 = vpack.c.b16 %v560, %v558
    %v731 = vpack.c.b16 %v563, %v561
    %v732 = vpack.c.b16 %v564, %v562
    %v733 = vpack.c.b16 %v567, %v565
    %v734 = vpack.c.b16 %v568, %v566
    %v735 = vpack.c.b16 %v571, %v569
    %v736 = vpack.c.b16 %v572, %v570
    %v737 = vpack.c.b16 %v575, %v573
    %v738 = vpack.c.b16 %v576, %v574
    %v739 = vpack.c.b16 %v579, %v577
    %v740 = vpack.c.b16 %v580, %v578
    %v741 = vpack.c.b16 %v583, %v581
    %v742 = vpack.c.b16 %v584, %v582
    %v743 = vpack.c.b16 %v587, %v585
    %v744 = vpack.c.b16 %v588, %v586
    %v745 = vpack.c.b16 %v591, %v589
    %v746 = vpack.c.b16 %v592, %v590
    %v747 = vpack.c.b16 %v595, %v593
    %v748 = vpack.c.b16 %v596, %v594
    %v749 = vpack.c.b16 %v599, %v597
    %v750 = vpack.c.b16 %v600, %v598
    %v751 = vpack.c.b16 %v603, %v601
    %v752 = vpack.c.b16 %v604, %v602
    %v753 = vpack.c.b16 %v607, %v605
    %v754 = vpack.c.b16 %v608, %v606
    %v755 = vpack.c.b16 %v611, %v609
    %v756 = vpack.c.b16 %v612, %v610
    %v757 = vpack.c.b16 %v615, %v613
    %v758 = vpack.c.b16 %v616, %v614
    %v759 = vpack.c.b16 %v619, %v617
    %v760 = vpack.c.b16 %v620, %v618
    %v761 = vpack.c.b16 %v623, %v621
    %v762 = vpack.c.b16 %v624, %v622
    %v763 = vpack.c.b16 %v627, %v625
    %v764 = vpack.c.b16 %v628, %v626
    %v765 = vpack.c.b16 %v631, %v629
    %v766 = vpack.c.b16 %v632, %v630
    %v767 = vpack.c.b16 %v635, %v633
    %v768 = vpack.c.b16 %v636, %v634
    %v769 = vpack.c.b16 %v639, %v637
    %v770 = vpack.c.b16 %v640, %v638
    %v771 = vpack.c.b16 %v643, %v641
    %v772 = vpack.c.b16 %v644, %v642
    %901 = vmatprep.subr.bf16.mxu0 %v646
    %902 = vmatpush1.bf16.msra.mxu0 %v645
    %903 = vmatprep.subr.bf16.mxu0 %v648
    %904 = vmatpush1.bf16.msra.mxu0 %v647
    %905 = vmatprep.subr.bf16.mxu0 %v650
    %906 = vmatpush1.bf16.msra.mxu0 %v649
    %907 = vmatprep.subr.bf16.mxu0 %v652
    %908 = vmatpush1.bf16.msra.mxu0 %v651
    %909 = vmatprep.subr.bf16.mxu0 %v654
    %910 = vmatpush1.bf16.msra.mxu0 %v653
    %911 = vmatprep.subr.bf16.mxu0 %v656
    %912 = vmatpush1.bf16.msra.mxu0 %v655
    %913 = vmatprep.subr.bf16.mxu0 %v658
    %914 = vmatpush1.bf16.msra.mxu0 %v657
    %915 = vmatprep.subr.bf16.mxu0 %v660
    %916 = vmatpush1.bf16.msra.mxu0 %v659
    %917 = vmatprep.subr.bf16.mxu0 %v662
    %918 = vmatpush1.bf16.msra.mxu0 %v661
    %919 = vmatprep.subr.bf16.mxu0 %v664
    %920 = vmatpush1.bf16.msra.mxu0 %v663
    %921 = vmatprep.subr.bf16.mxu0 %v666
    %922 = vmatpush1.bf16.msra.mxu0 %v665
    %923 = vmatprep.subr.bf16.mxu0 %v668
    %924 = vmatpush1.bf16.msra.mxu0 %v667
    %925 = vmatprep.subr.bf16.mxu0 %v670
    %926 = vmatpush1.bf16.msra.mxu0 %v669
    %927 = vmatprep.subr.bf16.mxu0 %v672
    %928 = vmatpush1.bf16.msra.mxu0 %v671
    %929 = vmatprep.subr.bf16.mxu0 %v674
    %930 = vmatpush1.bf16.msra.mxu0 %v673
    %931 = vmatprep.subr.bf16.mxu0 %v676
    %932 = vmatpush1.bf16.msra.mxu0 %v675
    %933 = vmatprep.mubr.bf16.mxu0 %v114
    %934 = vmatmul.mubr.bf16.gmra.mrb[0].mxu0 %v113
    %v935 = vpop.f32.mrb[0].mxu0
    %v936 = vadd.f32 %v254, %v935
    %v937 = vpop.f32.mrb[0].mxu0
    %v938 = vadd.f32 %v258, %v937
    %v939 = vpop.f32.mrb[0].mxu0
    %v940 = vpop.f32.mrb[0].mxu0
    %941 = vdwg.mxu0
    %942 = vmatprep.subr.bf16.mxu0 %v678
    %943 = vmatpush1.bf16.msra.mxu0 %v677
    %944 = vmatprep.subr.bf16.mxu0 %v680
    %945 = vmatpush1.bf16.msra.mxu0 %v679
    %946 = vmatprep.subr.bf16.mxu0 %v682
    %947 = vmatpush1.bf16.msra.mxu0 %v681
    %948 = vmatprep.subr.bf16.mxu0 %v684
    %949 = vmatpush1.bf16.msra.mxu0 %v683
    %950 = vmatprep.subr.bf16.mxu0 %v686
    %951 = vmatpush1.bf16.msra.mxu0 %v685
    %952 = vmatprep.subr.bf16.mxu0 %v688
    %953 = vmatpush1.bf16.msra.mxu0 %v687
    %954 = vmatprep.subr.bf16.mxu0 %v690
    %955 = vmatpush1.bf16.msra.mxu0 %v689
    %956 = vmatprep.subr.bf16.mxu0 %v692
    %957 = vmatpush1.bf16.msra.mxu0 %v691
    %958 = vmatprep.subr.bf16.mxu0 %v694
    %959 = vmatpush1.bf16.msra.mxu0 %v693
    %960 = vmatprep.subr.bf16.mxu0 %v696
    %961 = vmatpush1.bf16.msra.mxu0 %v695
    %962 = vmatprep.subr.bf16.mxu0 %v698
    %963 = vmatpush1.bf16.msra.mxu0 %v697
    %964 = vmatprep.subr.bf16.mxu0 %v700
    %965 = vmatpush1.bf16.msra.mxu0 %v699
    %966 = vmatprep.subr.bf16.mxu0 %v702
    %967 = vmatpush1.bf16.msra.mxu0 %v701
    %968 = vmatprep.subr.bf16.mxu0 %v704
    %969 = vmatpush1.bf16.msra.mxu0 %v703
    %970 = vmatprep.subr.bf16.mxu0 %v706
    %971 = vmatpush1.bf16.msra.mxu0 %v705
    %972 = vmatprep.subr.bf16.mxu0 %v708
    %973 = vmatpush1.bf16.msra.mxu0 %v707
    %974 = vmatprep.mubr.bf16.mxu0 %v116
    %975 = vmatmul.mubr.bf16.gmra.mrb[0].mxu0 %v115
    %v976 = vpop.f32.mrb[0].mxu0
    %v977 = vadd.f32 %v936, %v976
    %v978 = vpop.f32.mrb[0].mxu0
    %v979 = vadd.f32 %v938, %v978
    %v980 = vpop.f32.mrb[0].mxu0
    %v981 = vpop.f32.mrb[0].mxu0
    %982 = vdwg.mxu0
    %983 = vmatprep.subr.bf16.mxu0 %v710
    %984 = vmatpush1.bf16.msra.mxu0 %v709
    %985 = vmatprep.subr.bf16.mxu0 %v712
    %986 = vmatpush1.bf16.msra.mxu0 %v711
    %987 = vmatprep.subr.bf16.mxu0 %v714
    %988 = vmatpush1.bf16.msra.mxu0 %v713
    %989 = vmatprep.subr.bf16.mxu0 %v716
    %990 = vmatpush1.bf16.msra.mxu0 %v715
    %991 = vmatprep.subr.bf16.mxu0 %v718
    %992 = vmatpush1.bf16.msra.mxu0 %v717
    %993 = vmatprep.subr.bf16.mxu0 %v720
    %994 = vmatpush1.bf16.msra.mxu0 %v719
    %995 = vmatprep.subr.bf16.mxu0 %v722
    %996 = vmatpush1.bf16.msra.mxu0 %v721
    %997 = vmatprep.subr.bf16.mxu0 %v724
    %998 = vmatpush1.bf16.msra.mxu0 %v723
    %999 = vmatprep.subr.bf16.mxu0 %v726
    %1000 = vmatpush1.bf16.msra.mxu0 %v725
    %1001 = vmatprep.subr.bf16.mxu0 %v728
    %1002 = vmatpush1.bf16.msra.mxu0 %v727
    %1003 = vmatprep.subr.bf16.mxu0 %v730
    %1004 = vmatpush1.bf16.msra.mxu0 %v729
    %1005 = vmatprep.subr.bf16.mxu0 %v732
    %1006 = vmatpush1.bf16.msra.mxu0 %v731
    %1007 = vmatprep.subr.bf16.mxu0 %v734
    %1008 = vmatpush1.bf16.msra.mxu0 %v733
    %1009 = vmatprep.subr.bf16.mxu0 %v736
    %1010 = vmatpush1.bf16.msra.mxu0 %v735
    %1011 = vmatprep.subr.bf16.mxu0 %v738
    %1012 = vmatpush1.bf16.msra.mxu0 %v737
    %1013 = vmatprep.subr.bf16.mxu0 %v740
    %1014 = vmatpush1.bf16.msra.mxu0 %v739
    %1015 = vmatprep.mubr.bf16.mxu0 %v118
    %1016 = vmatmul.mubr.bf16.gmra.mrb[0].mxu0 %v117
    %v1017 = vpop.f32.mrb[0].mxu0
    %v1018 = vadd.f32 %v977, %v1017
    %v1019 = vpop.f32.mrb[0].mxu0
    %v1020 = vadd.f32 %v979, %v1019
    %v1021 = vpop.f32.mrb[0].mxu0
    %v1022 = vpop.f32.mrb[0].mxu0
    %1023 = vdwg.mxu0
    %1024 = vmatprep.subr.bf16.mxu0 %v742
    %1025 = vmatpush1.bf16.msra.mxu0 %v741
    %1026 = vmatprep.subr.bf16.mxu0 %v744
    %1027 = vmatpush1.bf16.msra.mxu0 %v743
    %1028 = vmatprep.subr.bf16.mxu0 %v746
    %1029 = vmatpush1.bf16.msra.mxu0 %v745
    %1030 = vmatprep.subr.bf16.mxu0 %v748
    %1031 = vmatpush1.bf16.msra.mxu0 %v747
    %1032 = vmatprep.subr.bf16.mxu0 %v750
    %1033 = vmatpush1.bf16.msra.mxu0 %v749
    %1034 = vmatprep.subr.bf16.mxu0 %v752
    %1035 = vmatpush1.bf16.msra.mxu0 %v751
    %1036 = vmatprep.subr.bf16.mxu0 %v754
    %1037 = vmatpush1.bf16.msra.mxu0 %v753
    %1038 = vmatprep.subr.bf16.mxu0 %v756
    %1039 = vmatpush1.bf16.msra.mxu0 %v755
    %1040 = vmatprep.subr.bf16.mxu0 %v758
    %1041 = vmatpush1.bf16.msra.mxu0 %v757
    %1042 = vmatprep.subr.bf16.mxu0 %v760
    %1043 = vmatpush1.bf16.msra.mxu0 %v759
    %1044 = vmatprep.subr.bf16.mxu0 %v762
    %1045 = vmatpush1.bf16.msra.mxu0 %v761
    %1046 = vmatprep.subr.bf16.mxu0 %v764
    %1047 = vmatpush1.bf16.msra.mxu0 %v763
    %1048 = vmatprep.subr.bf16.mxu0 %v766
    %1049 = vmatpush1.bf16.msra.mxu0 %v765
    %1050 = vmatprep.subr.bf16.mxu0 %v768
    %1051 = vmatpush1.bf16.msra.mxu0 %v767
    %1052 = vmatprep.subr.bf16.mxu0 %v770
    %1053 = vmatpush1.bf16.msra.mxu0 %v769
    %1054 = vmatprep.subr.bf16.mxu0 %v772
    %1055 = vmatpush1.bf16.msra.mxu0 %v771
    %1056 = vmatprep.mubr.bf16.mxu0 %v120
    %1057 = vmatmul.mubr.bf16.gmra.mrb[0].mxu0 %v119
    %v1058 = vpop.f32.mrb[0].mxu0
    %v1059 = vadd.f32 %v1018, %v1058
    %v1060 = vpop.f32.mrb[0].mxu0
    %v1061 = vadd.f32 %v1020, %v1060
    %v1062 = vpop.f32.mrb[0].mxu0
    %v1063 = vpop.f32.mrb[0].mxu0
    %1064 = vdwg.mxu0
    %v1065 = vmul.f32 %v1061, 0.5
    %v1066 = vmul.f32 %v1065, 1.442695
    %v1067 = vpow.pop %v1066
    %v1068 = vld [vmem:[%s3] sm:$0x3]
    %v1069 = vmul.f32 %v1067, %v1068
    %v1070 = vadd.f32 %v1059, %v1069
    %v1071 = vpack.c.bf16 %v1070, %v1070
    %v1072 = vld [vmem:[#allocation7] sm:$0xff]
    %v1073 = vld [vmem:[#allocation7 + $0x8] sm:$0xff]
    %v1074 = vld [vmem:[#allocation7 + $0x10] sm:$0xff]
    %v1075 = vld [vmem:[#allocation7 + $0x18] sm:$0xff]
    %v1076 = vld [vmem:[#allocation7 + $0x20] sm:$0xff]
    %v1077 = vld [vmem:[#allocation7 + $0x28] sm:$0xff]
    %v1078 = vld [vmem:[#allocation7 + $0x30] sm:$0xff]
    %v1079 = vld [vmem:[#allocation7 + $0x38] sm:$0xff]
    %v1080 = vld [vmem:[#allocation7 + $0x40] sm:$0xff]
    %v1081 = vld [vmem:[#allocation7 + $0x48] sm:$0xff]
    %v1082 = vld [vmem:[#allocation7 + $0x50] sm:$0xff]
    %v1083 = vld [vmem:[#allocation7 + $0x58] sm:$0xff]
    %v1084 = vld [vmem:[#allocation7 + $0x60] sm:$0xff]
    %v1085 = vld [vmem:[#allocation7 + $0x68] sm:$0xff]
    %v1086 = vld [vmem:[#allocation7 + $0x70] sm:$0xff]
    %v1087 = vld [vmem:[#allocation7 + $0x78] sm:$0xff]
    %v1088 = vld [vmem:[#allocation7 + $0x80] sm:$0xff]
    %v1089 = vld [vmem:[#allocation7 + $0x88] sm:$0xff]
    %v1090 = vld [vmem:[#allocation7 + $0x90] sm:$0xff]
    %v1091 = vld [vmem:[#allocation7 + $0x98] sm:$0xff]
    %v1092 = vld [vmem:[#allocation7 + $0xa0] sm:$0xff]
    %v1093 = vld [vmem:[#allocation7 + $0xa8] sm:$0xff]
    %v1094 = vld [vmem:[#allocation7 + $0xb0] sm:$0xff]
    %v1095 = vld [vmem:[#allocation7 + $0xb8] sm:$0xff]
    %v1096 = vld [vmem:[#allocation7 + $0xc0] sm:$0xff]
    %v1097 = vld [vmem:[#allocation7 + $0xc8] sm:$0xff]
    %v1098 = vld [vmem:[#allocation7 + $0xd0] sm:$0xff]
    %v1099 = vld [vmem:[#allocation7 + $0xd8] sm:$0xff]
    %v1100 = vld [vmem:[#allocation7 + $0xe0] sm:$0xff]
    %v1101 = vld [vmem:[#allocation7 + $0xe8] sm:$0xff]
    %v1102 = vld [vmem:[#allocation7 + $0xf0] sm:$0xff]
    %v1103 = vld [vmem:[#allocation7 + $0xf8] sm:$0xff]
    %v1104 = vld [vmem:[#allocation7 + $0x100] sm:$0xff]
    %v1105 = vld [vmem:[#allocation7 + $0x108] sm:$0xff]
    %v1106 = vld [vmem:[#allocation7 + $0x110] sm:$0xff]
    %v1107 = vld [vmem:[#allocation7 + $0x118] sm:$0xff]
    %v1108 = vld [vmem:[#allocation7 + $0x120] sm:$0xff]
    %v1109 = vld [vmem:[#allocation7 + $0x128] sm:$0xff]
    %v1110 = vld [vmem:[#allocation7 + $0x130] sm:$0xff]
    %v1111 = vld [vmem:[#allocation7 + $0x138] sm:$0xff]
    %v1112 = vld [vmem:[#allocation7 + $0x140] sm:$0xff]
    %v1113 = vld [vmem:[#allocation7 + $0x148] sm:$0xff]
    %v1114 = vld [vmem:[#allocation7 + $0x150] sm:$0xff]
    %v1115 = vld [vmem:[#allocation7 + $0x158] sm:$0xff]
    %v1116 = vld [vmem:[#allocation7 + $0x160] sm:$0xff]
    %v1117 = vld [vmem:[#allocation7 + $0x168] sm:$0xff]
    %v1118 = vld [vmem:[#allocation7 + $0x170] sm:$0xff]
    %v1119 = vld [vmem:[#allocation7 + $0x178] sm:$0xff]
    %v1120 = vld [vmem:[#allocation7 + $0x180] sm:$0xff]
    %v1121 = vld [vmem:[#allocation7 + $0x188] sm:$0xff]
    %v1122 = vld [vmem:[#allocation7 + $0x190] sm:$0xff]
    %v1123 = vld [vmem:[#allocation7 + $0x198] sm:$0xff]
    %v1124 = vld [vmem:[#allocation7 + $0x1a0] sm:$0xff]
    %v1125 = vld [vmem:[#allocation7 + $0x1a8] sm:$0xff]
    %v1126 = vld [vmem:[#allocation7 + $0x1b0] sm:$0xff]
    %v1127 = vld [vmem:[#allocation7 + $0x1b8] sm:$0xff]
    %v1128 = vld [vmem:[#allocation7 + $0x1c0] sm:$0xff]
    %v1129 = vld [vmem:[#allocation7 + $0x1c8] sm:$0xff]
    %v1130 = vld [vmem:[#allocation7 + $0x1d0] sm:$0xff]
    %v1131 = vld [vmem:[#allocation7 + $0x1d8] sm:$0xff]
    %v1132 = vld [vmem:[#allocation7 + $0x1e0] sm:$0xff]
    %v1133 = vld [vmem:[#allocation7 + $0x1e8] sm:$0xff]
    %v1134 = vld [vmem:[#allocation7 + $0x1f0] sm:$0xff]
    %v1135 = vld [vmem:[#allocation7 + $0x1f8] sm:$0xff]
    %v1136 = vld [vmem:[%s5] sm:$0xff]
    %v1138 = vlaneseq
    %v1139 = vshrl.u32 %v1138, 7
    %v1140 = vsub.s32 0, %v1139
    %v1141 = vrot.slane %v1136, %v1140
    %v1142 = vlaneseq
    %v1143 = vshrl.u32 %v1142, 7
    %v1144 = vsub.s32 1, %v1143
    %v1145 = vrot.slane %v1136, %v1144
    %v1146 = vlaneseq
    %v1147 = vshrl.u32 %v1146, 7
    %v1148 = vsub.s32 2, %v1147
    %v1149 = vrot.slane %v1136, %v1148
    %v1150 = vlaneseq
    %v1151 = vshrl.u32 %v1150, 7
    %v1152 = vsub.s32 3, %v1151
    %v1153 = vrot.slane %v1136, %v1152
    %v1154 = vlaneseq
    %v1155 = vshrl.u32 %v1154, 7
    %v1156 = vsub.s32 4, %v1155
    %v1157 = vrot.slane %v1136, %v1156
    %v1158 = vlaneseq
    %v1159 = vshrl.u32 %v1158, 7
    %v1160 = vsub.s32 5, %v1159
    %v1161 = vrot.slane %v1136, %v1160
    %v1162 = vlaneseq
    %v1163 = vshrl.u32 %v1162, 7
    %v1164 = vsub.s32 6, %v1163
    %v1165 = vrot.slane %v1136, %v1164
    %v1166 = vlaneseq
    %v1167 = vshrl.u32 %v1166, 7
    %v1168 = vsub.s32 7, %v1167
    %v1169 = vrot.slane %v1136, %v1168
    %v1242 = vunpack.c.l.b16 %v1072
    %v1243 = vunpack.c.h.b16 %v1072
    %v1244 = vunpack.c.l.b16 %v1073
    %v1245 = vunpack.c.h.b16 %v1073
    %v1246 = vunpack.c.l.b16 %v1074
    %v1247 = vunpack.c.h.b16 %v1074
    %v1248 = vunpack.c.l.b16 %v1075
    %v1249 = vunpack.c.h.b16 %v1075
    %v1250 = vunpack.c.l.b16 %v1076
    %v1251 = vunpack.c.h.b16 %v1076
    %v1252 = vunpack.c.l.b16 %v1077
    %v1253 = vunpack.c.h.b16 %v1077
    %v1254 = vunpack.c.l.b16 %v1078
    %v1255 = vunpack.c.h.b16 %v1078
    %v1256 = vunpack.c.l.b16 %v1079
    %v1257 = vunpack.c.h.b16 %v1079
    %v1258 = vunpack.c.l.b16 %v1080
    %v1259 = vunpack.c.h.b16 %v1080
    %v1260 = vunpack.c.l.b16 %v1081
    %v1261 = vunpack.c.h.b16 %v1081
    %v1262 = vunpack.c.l.b16 %v1082
    %v1263 = vunpack.c.h.b16 %v1082
    %v1264 = vunpack.c.l.b16 %v1083
    %v1265 = vunpack.c.h.b16 %v1083
    %v1266 = vunpack.c.l.b16 %v1084
    %v1267 = vunpack.c.h.b16 %v1084
    %v1268 = vunpack.c.l.b16 %v1085
    %v1269 = vunpack.c.h.b16 %v1085
    %v1270 = vunpack.c.l.b16 %v1086
    %v1271 = vunpack.c.h.b16 %v1086
    %v1272 = vunpack.c.l.b16 %v1087
    %v1273 = vunpack.c.h.b16 %v1087
    %v1274 = vunpack.c.l.b16 %v1088
    %v1275 = vunpack.c.h.b16 %v1088
    %v1276 = vunpack.c.l.b16 %v1089
    %v1277 = vunpack.c.h.b16 %v1089
    %v1278 = vunpack.c.l.b16 %v1090
    %v1279 = vunpack.c.h.b16 %v1090
    %v1280 = vunpack.c.l.b16 %v1091
    %v1281 = vunpack.c.h.b16 %v1091
    %v1282 = vunpack.c.l.b16 %v1092
    %v1283 = vunpack.c.h.b16 %v1092
    %v1284 = vunpack.c.l.b16 %v1093
    %v1285 = vunpack.c.h.b16 %v1093
    %v1286 = vunpack.c.l.b16 %v1094
    %v1287 = vunpack.c.h.b16 %v1094
    %v1288 = vunpack.c.l.b16 %v1095
    %v1289 = vunpack.c.h.b16 %v1095
    %v1290 = vunpack.c.l.b16 %v1096
    %v1291 = vunpack.c.h.b16 %v1096
    %v1292 = vunpack.c.l.b16 %v1097
    %v1293 = vunpack.c.h.b16 %v1097
    %v1294 = vunpack.c.l.b16 %v1098
    %v1295 = vunpack.c.h.b16 %v1098
    %v1296 = vunpack.c.l.b16 %v1099
    %v1297 = vunpack.c.h.b16 %v1099
    %v1298 = vunpack.c.l.b16 %v1100
    %v1299 = vunpack.c.h.b16 %v1100
    %v1300 = vunpack.c.l.b16 %v1101
    %v1301 = vunpack.c.h.b16 %v1101
    %v1302 = vunpack.c.l.b16 %v1102
    %v1303 = vunpack.c.h.b16 %v1102
    %v1304 = vunpack.c.l.b16 %v1103
    %v1305 = vunpack.c.h.b16 %v1103
    %v1306 = vunpack.c.l.b16 %v1104
    %v1307 = vunpack.c.h.b16 %v1104
    %v1308 = vunpack.c.l.b16 %v1105
    %v1309 = vunpack.c.h.b16 %v1105
    %v1310 = vunpack.c.l.b16 %v1106
    %v1311 = vunpack.c.h.b16 %v1106
    %v1312 = vunpack.c.l.b16 %v1107
    %v1313 = vunpack.c.h.b16 %v1107
    %v1314 = vunpack.c.l.b16 %v1108
    %v1315 = vunpack.c.h.b16 %v1108
    %v1316 = vunpack.c.l.b16 %v1109
    %v1317 = vunpack.c.h.b16 %v1109
    %v1318 = vunpack.c.l.b16 %v1110
    %v1319 = vunpack.c.h.b16 %v1110
    %v1320 = vunpack.c.l.b16 %v1111
    %v1321 = vunpack.c.h.b16 %v1111
    %v1322 = vunpack.c.l.b16 %v1112
    %v1323 = vunpack.c.h.b16 %v1112
    %v1324 = vunpack.c.l.b16 %v1113
    %v1325 = vunpack.c.h.b16 %v1113
    %v1326 = vunpack.c.l.b16 %v1114
    %v1327 = vunpack.c.h.b16 %v1114
    %v1328 = vunpack.c.l.b16 %v1115
    %v1329 = vunpack.c.h.b16 %v1115
    %v1330 = vunpack.c.l.b16 %v1116
    %v1331 = vunpack.c.h.b16 %v1116
    %v1332 = vunpack.c.l.b16 %v1117
    %v1333 = vunpack.c.h.b16 %v1117
    %v1334 = vunpack.c.l.b16 %v1118
    %v1335 = vunpack.c.h.b16 %v1118
    %v1336 = vunpack.c.l.b16 %v1119
    %v1337 = vunpack.c.h.b16 %v1119
    %v1338 = vunpack.c.l.b16 %v1120
    %v1339 = vunpack.c.h.b16 %v1120
    %v1340 = vunpack.c.l.b16 %v1121
    %v1341 = vunpack.c.h.b16 %v1121
    %v1342 = vunpack.c.l.b16 %v1122
    %v1343 = vunpack.c.h.b16 %v1122
    %v1344 = vunpack.c.l.b16 %v1123
    %v1345 = vunpack.c.h.b16 %v1123
    %v1346 = vunpack.c.l.b16 %v1124
    %v1347 = vunpack.c.h.b16 %v1124
    %v1348 = vunpack.c.l.b16 %v1125
    %v1349 = vunpack.c.h.b16 %v1125
    %v1350 = vunpack.c.l.b16 %v1126
    %v1351 = vunpack.c.h.b16 %v1126
    %v1352 = vunpack.c.l.b16 %v1127
    %v1353 = vunpack.c.h.b16 %v1127
    %v1354 = vunpack.c.l.b16 %v1128
    %v1355 = vunpack.c.h.b16 %v1128
    %v1356 = vunpack.c.l.b16 %v1129
    %v1357 = vunpack.c.h.b16 %v1129
    %v1358 = vunpack.c.l.b16 %v1130
    %v1359 = vunpack.c.h.b16 %v1130
    %v1360 = vunpack.c.l.b16 %v1131
    %v1361 = vunpack.c.h.b16 %v1131
    %v1362 = vunpack.c.l.b16 %v1132
    %v1363 = vunpack.c.h.b16 %v1132
    %v1364 = vunpack.c.l.b16 %v1133
    %v1365 = vunpack.c.h.b16 %v1133
    %v1366 = vunpack.c.l.b16 %v1134
    %v1367 = vunpack.c.h.b16 %v1134
    %v1368 = vunpack.c.l.b16 %v1135
    %v1369 = vunpack.c.h.b16 %v1135
    %v1370 = vpack.c.b16 %v1250, %v1242
    %v1371 = vpack.c.b16 %v1251, %v1243
    %v1372 = vpack.c.b16 %v1252, %v1244
    %v1373 = vpack.c.b16 %v1253, %v1245
    %v1374 = vpack.c.b16 %v1254, %v1246
    %v1375 = vpack.c.b16 %v1255, %v1247
    %v1376 = vpack.c.b16 %v1256, %v1248
    %v1377 = vpack.c.b16 %v1257, %v1249
    %v1378 = vpack.c.b16 %v1266, %v1258
    %v1379 = vpack.c.b16 %v1267, %v1259
    %v1380 = vpack.c.b16 %v1268, %v1260
    %v1381 = vpack.c.b16 %v1269, %v1261
    %v1382 = vpack.c.b16 %v1270, %v1262
    %v1383 = vpack.c.b16 %v1271, %v1263
    %v1384 = vpack.c.b16 %v1272, %v1264
    %v1385 = vpack.c.b16 %v1273, %v1265
    %v1386 = vpack.c.b16 %v1282, %v1274
    %v1387 = vpack.c.b16 %v1283, %v1275
    %v1388 = vpack.c.b16 %v1284, %v1276
    %v1389 = vpack.c.b16 %v1285, %v1277
    %v1390 = vpack.c.b16 %v1286, %v1278
    %v1391 = vpack.c.b16 %v1287, %v1279
    %v1392 = vpack.c.b16 %v1288, %v1280
    %v1393 = vpack.c.b16 %v1289, %v1281
    %v1394 = vpack.c.b16 %v1298, %v1290
    %v1395 = vpack.c.b16 %v1299, %v1291
    %v1396 = vpack.c.b16 %v1300, %v1292
    %v1397 = vpack.c.b16 %v1301, %v1293
    %v1398 = vpack.c.b16 %v1302, %v1294
    %v1399 = vpack.c.b16 %v1303, %v1295
    %v1400 = vpack.c.b16 %v1304, %v1296
    %v1401 = vpack.c.b16 %v1305, %v1297
    %v1402 = vpack.c.b16 %v1314, %v1306
    %v1403 = vpack.c.b16 %v1315, %v1307
    %v1404 = vpack.c.b16 %v1316, %v1308
    %v1405 = vpack.c.b16 %v1317, %v1309
    %v1406 = vpack.c.b16 %v1318, %v1310
    %v1407 = vpack.c.b16 %v1319, %v1311
    %v1408 = vpack.c.b16 %v1320, %v1312
    %v1409 = vpack.c.b16 %v1321, %v1313
    %v1410 = vpack.c.b16 %v1330, %v1322
    %v1411 = vpack.c.b16 %v1331, %v1323
    %v1412 = vpack.c.b16 %v1332, %v1324
    %v1413 = vpack.c.b16 %v1333, %v1325
    %v1414 = vpack.c.b16 %v1334, %v1326
    %v1415 = vpack.c.b16 %v1335, %v1327
    %v1416 = vpack.c.b16 %v1336, %v1328
    %v1417 = vpack.c.b16 %v1337, %v1329
    %v1418 = vpack.c.b16 %v1346, %v1338
    %v1419 = vpack.c.b16 %v1347, %v1339
    %v1420 = vpack.c.b16 %v1348, %v1340
    %v1421 = vpack.c.b16 %v1349, %v1341
    %v1422 = vpack.c.b16 %v1350, %v1342
    %v1423 = vpack.c.b16 %v1351, %v1343
    %v1424 = vpack.c.b16 %v1352, %v1344
    %v1425 = vpack.c.b16 %v1353, %v1345
    %v1426 = vpack.c.b16 %v1362, %v1354
    %v1427 = vpack.c.b16 %v1363, %v1355
    %v1428 = vpack.c.b16 %v1364, %v1356
    %v1429 = vpack.c.b16 %v1365, %v1357
    %v1430 = vpack.c.b16 %v1366, %v1358
    %v1431 = vpack.c.b16 %v1367, %v1359
    %v1432 = vpack.c.b16 %v1368, %v1360
    %v1433 = vpack.c.b16 %v1369, %v1361
    %1498 = vmatprep.subr.bf16.mxu0 %v1371
    %1499 = vmatpush1.bf16.msra.mxu0 %v1370
    %1500 = vmatprep.subr.bf16.mxu0 %v1379
    %1501 = vmatpush1.bf16.msra.mxu0 %v1378
    %1502 = vmatprep.subr.bf16.mxu0 %v1387
    %1503 = vmatpush1.bf16.msra.mxu0 %v1386
    %1504 = vmatprep.subr.bf16.mxu0 %v1395
    %1505 = vmatpush1.bf16.msra.mxu0 %v1394
    %1506 = vmatprep.subr.bf16.mxu0 %v1403
    %1507 = vmatpush1.bf16.msra.mxu0 %v1402
    %1508 = vmatprep.subr.bf16.mxu0 %v1411
    %1509 = vmatpush1.bf16.msra.mxu0 %v1410
    %1510 = vmatprep.subr.bf16.mxu0 %v1419
    %1511 = vmatpush1.bf16.msra.mxu0 %v1418
    %1512 = vmatprep.subr.bf16.mxu0 %v1427
    %1513 = vmatpush1.bf16.msra.mxu0 %v1426
    %1514 = vmatprep.subr.bf16.mxu0 0
    %1515 = vmatpush1.bf16.msra.mxu0 0
    %1516 = vmatprep.subr.bf16.mxu0 0
    %1517 = vmatpush1.bf16.msra.mxu0 0
    %1518 = vmatprep.subr.bf16.mxu0 0
    %1519 = vmatpush1.bf16.msra.mxu0 0
    %1520 = vmatprep.subr.bf16.mxu0 0
    %1521 = vmatpush1.bf16.msra.mxu0 0
    %1522 = vmatprep.subr.bf16.mxu0 0
    %1523 = vmatpush1.bf16.msra.mxu0 0
    %1524 = vmatprep.subr.bf16.mxu0 0
    %1525 = vmatpush1.bf16.msra.mxu0 0
    %1526 = vmatprep.subr.bf16.mxu0 0
    %1527 = vmatpush1.bf16.msra.mxu0 0
    %1528 = vmatprep.subr.bf16.mxu0 0
    %1529 = vmatpush1.bf16.msra.mxu0 0
    %1530 = vmatprep.mubr.bf16.mxu0 0
    %1531 = vmatmul.mubr.bf16.gmra.mrb[0].mxu0 %v1071
    %v1532 = vpop.f32.mrb[0].mxu0
    %v1533 = vadd.f32 %v1141, %v1532
    %v1534 = vpop.f32.mrb[0].mxu0
    %v1535 = vadd.f32 %v1145, %v1534
    %v1536 = vpop.f32.mrb[0].mxu0
    %v1537 = vpop.f32.mrb[0].mxu0
    %1538 = vdwg.mxu0
    %1539 = vmatprep.subr.bf16.mxu0 %v1373
    %1540 = vmatpush1.bf16.msra.mxu0 %v1372
    %1541 = vmatprep.subr.bf16.mxu0 %v1381
    %1542 = vmatpush1.bf16.msra.mxu0 %v1380
    %1543 = vmatprep.subr.bf16.mxu0 %v1389
    %1544 = vmatpush1.bf16.msra.mxu0 %v1388
    %1545 = vmatprep.subr.bf16.mxu0 %v1397
    %1546 = vmatpush1.bf16.msra.mxu0 %v1396
    %1547 = vmatprep.subr.bf16.mxu0 %v1405
    %1548 = vmatpush1.bf16.msra.mxu0 %v1404
    %1549 = vmatprep.subr.bf16.mxu0 %v1413
    %1550 = vmatpush1.bf16.msra.mxu0 %v1412
    %1551 = vmatprep.subr.bf16.mxu0 %v1421
    %1552 = vmatpush1.bf16.msra.mxu0 %v1420
    %1553 = vmatprep.subr.bf16.mxu0 %v1429
    %1554 = vmatpush1.bf16.msra.mxu0 %v1428
    %1555 = vmatprep.subr.bf16.mxu0 0
    %1556 = vmatpush1.bf16.msra.mxu0 0
    %1557 = vmatprep.subr.bf16.mxu0 0
    %1558 = vmatpush1.bf16.msra.mxu0 0
    %1559 = vmatprep.subr.bf16.mxu0 0
    %1560 = vmatpush1.bf16.msra.mxu0 0
    %1561 = vmatprep.subr.bf16.mxu0 0
    %1562 = vmatpush1.bf16.msra.mxu0 0
    %1563 = vmatprep.subr.bf16.mxu0 0
    %1564 = vmatpush1.bf16.msra.mxu0 0
    %1565 = vmatprep.subr.bf16.mxu0 0
    %1566 = vmatpush1.bf16.msra.mxu0 0
    %1567 = vmatprep.subr.bf16.mxu0 0
    %1568 = vmatpush1.bf16.msra.mxu0 0
    %1569 = vmatprep.subr.bf16.mxu0 0
    %1570 = vmatpush1.bf16.msra.mxu0 0
    %1571 = vmatprep.mubr.bf16.mxu0 0
    %1572 = vmatmul.mubr.bf16.gmra.mrb[0].mxu0 %v1071
    %v1573 = vpop.f32.mrb[0].mxu0
    %v1574 = vadd.f32 %v1149, %v1573
    %v1575 = vpop.f32.mrb[0].mxu0
    %v1576 = vadd.f32 %v1153, %v1575
    %v1577 = vpop.f32.mrb[0].mxu0
    %v1578 = vpop.f32.mrb[0].mxu0
    %1579 = vdwg.mxu0
    %1580 = vmatprep.subr.bf16.mxu0 %v1375
    %1581 = vmatpush1.bf16.msra.mxu0 %v1374
    %1582 = vmatprep.subr.bf16.mxu0 %v1383
    %1583 = vmatpush1.bf16.msra.mxu0 %v1382
    %1584 = vmatprep.subr.bf16.mxu0 %v1391
    %1585 = vmatpush1.bf16.msra.mxu0 %v1390
    %1586 = vmatprep.subr.bf16.mxu0 %v1399
    %1587 = vmatpush1.bf16.msra.mxu0 %v1398
    %1588 = vmatprep.subr.bf16.mxu0 %v1407
    %1589 = vmatpush1.bf16.msra.mxu0 %v1406
    %1590 = vmatprep.subr.bf16.mxu0 %v1415
    %1591 = vmatpush1.bf16.msra.mxu0 %v1414
    %1592 = vmatprep.subr.bf16.mxu0 %v1423
    %1593 = vmatpush1.bf16.msra.mxu0 %v1422
    %1594 = vmatprep.subr.bf16.mxu0 %v1431
    %1595 = vmatpush1.bf16.msra.mxu0 %v1430
    %1596 = vmatprep.subr.bf16.mxu0 0
    %1597 = vmatpush1.bf16.msra.mxu0 0
    %1598 = vmatprep.subr.bf16.mxu0 0
    %1599 = vmatpush1.bf16.msra.mxu0 0
    %1600 = vmatprep.subr.bf16.mxu0 0
    %1601 = vmatpush1.bf16.msra.mxu0 0
    %1602 = vmatprep.subr.bf16.mxu0 0
    %1603 = vmatpush1.bf16.msra.mxu0 0
    %1604 = vmatprep.subr.bf16.mxu0 0
    %1605 = vmatpush1.bf16.msra.mxu0 0
    %1606 = vmatprep.subr.bf16.mxu0 0
    %1607 = vmatpush1.bf16.msra.mxu0 0
    %1608 = vmatprep.subr.bf16.mxu0 0
    %1609 = vmatpush1.bf16.msra.mxu0 0
    %1610 = vmatprep.subr.bf16.mxu0 0
    %1611 = vmatpush1.bf16.msra.mxu0 0
    %1612 = vmatprep.mubr.bf16.mxu0 0
    %1613 = vmatmul.mubr.bf16.gmra.mrb[0].mxu0 %v1071
    %v1614 = vpop.f32.mrb[0].mxu0
    %v1615 = vadd.f32 %v1157, %v1614
    %v1616 = vpop.f32.mrb[0].mxu0
    %v1617 = vadd.f32 %v1161, %v1616
    %v1618 = vpop.f32.mrb[0].mxu0
    %v1619 = vpop.f32.mrb[0].mxu0
    %1620 = vdwg.mxu0
    %1621 = vmatprep.subr.bf16.mxu0 %v1377
    %1622 = vmatpush1.bf16.msra.mxu0 %v1376
    %1623 = vmatprep.subr.bf16.mxu0 %v1385
    %1624 = vmatpush1.bf16.msra.mxu0 %v1384
    %1625 = vmatprep.subr.bf16.mxu0 %v1393
    %1626 = vmatpush1.bf16.msra.mxu0 %v1392
    %1627 = vmatprep.subr.bf16.mxu0 %v1401
    %1628 = vmatpush1.bf16.msra.mxu0 %v1400
    %1629 = vmatprep.subr.bf16.mxu0 %v1409
    %1630 = vmatpush1.bf16.msra.mxu0 %v1408
    %1631 = vmatprep.subr.bf16.mxu0 %v1417
    %1632 = vmatpush1.bf16.msra.mxu0 %v1416
    %1633 = vmatprep.subr.bf16.mxu0 %v1425
    %1634 = vmatpush1.bf16.msra.mxu0 %v1424
    %1635 = vmatprep.subr.bf16.mxu0 %v1433
    %1636 = vmatpush1.bf16.msra.mxu0 %v1432
    %1637 = vmatprep.subr.bf16.mxu0 0
    %1638 = vmatpush1.bf16.msra.mxu0 0
    %1639 = vmatprep.subr.bf16.mxu0 0
    %1640 = vmatpush1.bf16.msra.mxu0 0
    %1641 = vmatprep.subr.bf16.mxu0 0
    %1642 = vmatpush1.bf16.msra.mxu0 0
    %1643 = vmatprep.subr.bf16.mxu0 0
    %1644 = vmatpush1.bf16.msra.mxu0 0
    %1645 = vmatprep.subr.bf16.mxu0 0
    %1646 = vmatpush1.bf16.msra.mxu0 0
    %1647 = vmatprep.subr.bf16.mxu0 0
    %1648 = vmatpush1.bf16.msra.mxu0 0
    %1649 = vmatprep.subr.bf16.mxu0 0
    %1650 = vmatpush1.bf16.msra.mxu0 0
    %1651 = vmatprep.subr.bf16.mxu0 0
    %1652 = vmatpush1.bf16.msra.mxu0 0
    %1653 = vmatprep.mubr.bf16.mxu0 0
    %1654 = vmatmul.mubr.bf16.gmra.mrb[0].mxu0 %v1071
    %v1655 = vpop.f32.mrb[0].mxu0
    %v1656 = vadd.f32 %v1165, %v1655
    %v1657 = vpop.f32.mrb[0].mxu0
    %v1658 = vadd.f32 %v1169, %v1657
    %v1659 = vpop.f32.mrb[0].mxu0
    %v1660 = vpop.f32.mrb[0].mxu0
    %1661 = vdwg.mxu0
    %v1670 = vcombine.low %v1533, %v1535
    %v1671 = vcombine.low %v1574, %v1576
    %v1673 = vunpack.c.l.s4 1983009808
    %v1674 = vunpack.c.0.s8 %v1673
    %v1675 = vlaneseq
    %v1676 = vshrl.u32 %v1675, 7
    %v1677 = vsub.s32 %v1674, %v1676
    %v1678 = vrot.slane %v1670, %v1677
    %v1680 = vunpack.c.l.s4 1983009808
    %v1681 = vunpack.c.0.s8 %v1680
    %v1682 = vlaneseq
    %v1683 = vshrl.u32 %v1682, 7
    %v1684 = vsub.s32 %v1681, %v1683
    %v1685 = vrot.slane %v1671, %v1684
    %v1686 = vcombine.low %v1678, %v1685
    %v1687 = vcombine.low %v1615, %v1617
    %v1688 = vcombine.low %v1656, %v1658
    %v1690 = vunpack.c.l.s4 1983009808
    %v1691 = vunpack.c.0.s8 %v1690
    %v1692 = vlaneseq
    %v1693 = vshrl.u32 %v1692, 7
    %v1694 = vsub.s32 %v1691, %v1693
    %v1695 = vrot.slane %v1687, %v1694
    %v1697 = vunpack.c.l.s4 1983009808
    %v1698 = vunpack.c.0.s8 %v1697
    %v1699 = vlaneseq
    %v1700 = vshrl.u32 %v1699, 7
    %v1701 = vsub.s32 %v1698, %v1700
    %v1702 = vrot.slane %v1688, %v1701
    %v1703 = vcombine.low %v1695, %v1702
    %1706 = vst [vmem:[#allocation8] sm:$0xff] %v1686
    %1707 = vst [vmem:[#allocation8 + $0x8] sm:$0xff] %v1703
    %v1710 = vcombine.low %v1059, %v1061
    %v1712 = vunpack.c.l.s4 1983009808
    %v1713 = vunpack.c.0.s8 %v1712
    %v1714 = vlaneseq
    %v1715 = vshrl.u32 %v1714, 7
    %v1716 = vsub.s32 %v1713, %v1715
    %v1717 = vrot.slane %v1710, %v1716
    %1719 = vst [vmem:[#allocation9] sm:$0xf] %v1717
    // Predicated region
    $region38: #{tpu_custom_call.1} parent=1 // pred_check
      _
    $region39: #{tpu_custom_call.1} parent=1 // pred_check_branch
      %1721 = sbr.rel (0) target = $region41
    $region40: #{tpu_custom_call.1} parent=1 // pred_region
      %s1723 = ssub.s32 256, 256
      %1724 = vsyncadd [#allocation4], %s1723
      %s1726 = sshll.u32 [#allocation8], 4
      %s1727 = int_to_ptr.vmem [resolvable:$true] %s1726
      %1729 = dma.vmem_to_hbm [thread:$0]  %s1727, 256, %s6, [#allocation4]
    $region41: #{tpu_custom_call.1} parent=1 // pred_fallthru
      _
    // Predicated region
    $region42: #{tpu_custom_call.1} parent=1 // pred_check
      _
    $region43: #{tpu_custom_call.1} parent=1 // pred_check_branch
      %1731 = sbr.rel (0) target = $region45
    $region44: #{tpu_custom_call.1} parent=1 // pred_region
      %s1733 = ssub.s32 64, 64
      %1734 = vsyncadd [#allocation10], %s1733
      %s1736 = sshll.u32 [#allocation9], 4
      %s1737 = int_to_ptr.vmem [resolvable:$true] %s1736
      %1739 = dma.vmem_to_hbm [thread:$0]  %s1737, 64, %s7, [#allocation10]
    $region45: #{tpu_custom_call.1} parent=1 // pred_fallthru
      _
    // Predicated region
    $region46: #{tpu_custom_call.1} parent=1 // pred_check
      _
    $region47: #{tpu_custom_call.1} parent=1 // pred_check_branch
      %1741 = sbr.rel (0) target = $region49
    $region48: #{tpu_custom_call.1} parent=1 // pred_region
      %1742 = dma.done [#allocation4], 256
    $region49: #{tpu_custom_call.1} parent=1 // pred_fallthru
      _
    // Predicated region
    $region50: #{tpu_custom_call.1} parent=1 // pred_check
      _
    $region51: #{tpu_custom_call.1} parent=1 // pred_check_branch
      %1744 = sbr.rel (0) target = $region53
    $region52: #{tpu_custom_call.1} parent=1 // pred_region
      %1745 = dma.done [#allocation10], 64
    $region53: #{tpu_custom_call.1} parent=1 // pred_fallthru
      _
    %1746 = vsyncpa [#allocation3], 1
    %1747 = vsyncpa [#allocation6], 1
    %1748 = vsyncpa [#allocation4], 1
    %1749 = vsyncpa [#allocation10], 1

</llo_original>
